<compile_context>
chip_gen: v6e
topology: v6e:2x2x1
jax: 0.10.0
libtpu: 0.0.40
codegen_flags: <defaults>
</compile_context>

<pallas_src>
import functools
import math

import jax
import jax.numpy as jnp
import numpy as np
from jax.experimental import pallas as pl
from jax.experimental.pallas import tpu as pltpu

KERNEL1 = 5          # first Conv1d kernel size
KERNEL2 = 3          # second Conv1d kernel size
PAD = 3              # ReplicationPad1d amount for kernel=5 (odd): (k-1)//2 + 1
LANE = 128           # TPU lane width
LANE_TARGET = 512    # target folded-lane width per grid block (re-derive smaller on v7x
                     # if per-block VMEM ever becomes the binding constraint)
NTAPS = KERNEL1 + KERNEL2


def _roll_lanes(x, shift):
    """np.roll semantics along the last (lane) axis with a static shift (XLU rotate)."""
    n = x.shape[-1]
    s = shift % n
    if s == 0:
        return x
    return pltpu.roll(x, shift=s, axis=x.ndim - 1)


# --------------------------------- the kernel ---------------------------------
def _interactor_kernel(x12_ref, wps_ref, wu_ref, b_ref, local_ref, out_ref, *, L):
    C2, BW = x12_ref.shape          # (2C, BLOCK_W); BLOCK_W is a multiple of 128
    C = C2 // 2

    x12 = x12_ref[...]              # single lane-dense load of the folded [x1; x2] slab
    b1ps = b_ref[:, 0:1]            # (2C, 1)
    b2ps = b_ref[:, 1:2]            # (2C, 1)
    b1u = b_ref[0:C, 2:3]           # (C, 1)
    b2u = b_ref[0:C, 3:4]           # (C, 1)
    local = local_ref[...]          # (1, BW) int32: lane index within each Lp-wide region

    # ---- fused phi(x1)/psi(x2): conv1(k=5) -> LeakyReLU -> conv2(k=3) -> tanh ----
    # Tap-matmuls over lane-rotated slabs.  Each batch element occupies Lp lanes and the
    # positions we keep only ever read lanes inside their own region, so no cross-batch
    # contamination.  Weights are block-diagonal so rows [:C] carry phi, rows [C:] psi.
    h = jnp.dot(wps_ref[0], x12, preferred_element_type=jnp.float32)
    for k in range(1, KERNEL1):
        h = h + jnp.dot(wps_ref[k], _roll_lanes(x12, -k),
                        preferred_element_type=jnp.float32)
    h = h + b1ps
    h = jnp.where(h > 0, h, 0.01 * h)          # LeakyReLU(0.01); Dropout == identity (eval)
    y = jnp.dot(wps_ref[KERNEL1], h, preferred_element_type=jnp.float32)
    for k in range(1, KERNEL2):
        y = y + jnp.dot(wps_ref[KERNEL1 + k], _roll_lanes(h, -k),
                        preferred_element_type=jnp.float32)
    y = jnp.tanh(y + b2ps)                     # (2C, BW), valid at local cols [0, L)

    # x1 / x2 aligned to output columns (drop the left replication pad).
    x12s = _roll_lanes(x12, -PAD)
    d = x12s[C:, :] * jnp.exp(y[0:C, :])       # x2 * exp(phi(x1))
    c = x12s[0:C, :] * jnp.exp(y[C:, :])       # x1 * exp(psi(x2))

    # ---- ReplicationPad1d(d) per batch element, done on the whole slab ----
    # Shift d to local cols [PAD, PAD+L), then spread each edge value outward PAD times
    # using masked lane-rotates (masks select exactly one local column per step).
    dp = _roll_lanes(d, PAD)
    for i in range(1, PAD + 1):
        dp = jnp.where(local == (PAD - i), _roll_lanes(dp, -1), dp)           # left edge
        dp = jnp.where(local == (PAD + L - 1 + i), _roll_lanes(dp, 1), dp)    # right edge

    # ---- U(d): conv1(k=5) -> LeakyReLU -> conv2(k=3) -> tanh ----
    hu = jnp.dot(wu_ref[0], dp, preferred_element_type=jnp.float32)
    for k in range(1, KERNEL1):
        hu = hu + jnp.dot(wu_ref[k], _roll_lanes(dp, -k),
                          preferred_element_type=jnp.float32)
    hu = hu + b1u
    hu = jnp.where(hu > 0, hu, 0.01 * hu)
    u = jnp.dot(wu_ref[KERNEL1], hu, preferred_element_type=jnp.float32)
    for k in range(1, KERNEL2):
        u = u + jnp.dot(wu_ref[KERNEL1 + k], _roll_lanes(hu, -k),
                        preferred_element_type=jnp.float32)
    u = jnp.tanh(u + b2u)

    out_ref[...] = c + u                       # single lane-dense, unmasked store


# ------------------------------ wrapper / weight prep ------------------------------
def _block_diag(a, b):
    z = jnp.zeros_like(a)
    return jnp.concatenate(
        [jnp.concatenate([a, z], axis=1), jnp.concatenate([z, b], axis=1)], axis=0)


@jax.jit
def interactor_generate(x1, x2, phi_params, psi_params, u_params):
    """x1, x2: (B, L, C) exactly as the PyTorch module receives them. Returns (B, C, L)."""
    B, L, C = x1.shape
    phi_w1, phi_b1, phi_w2, phi_b2 = phi_params
    psi_w1, psi_b1, psi_w2, psi_b2 = psi_params
    u_w1, u_b1, u_w2, u_b2 = u_params

    Lp = L + 2 * PAD                               # per-element slab width (rep-padded)
    TB = max(1, min(B, LANE_TARGET // Lp)) if Lp <= LANE_TARGET else 1
    n_blocks = (B + TB - 1) // TB
    BLOCK_W = ((TB * Lp + LANE - 1) // LANE) * LANE   # lane-dense block width
    Bp = n_blocks * TB

    # ---- packed weight operands (5 DMAs total instead of 14) ----
    wps = jnp.stack(
        [_block_diag(phi_w1[:, :, k], psi_w1[:, :, k]) for k in range(KERNEL1)]
        + [_block_diag(phi_w2[:, :, k], psi_w2[:, :, k]) for k in range(KERNEL2)]
    ).astype(jnp.float32)                                              # (8, 2C, 2C)
    wu = jnp.stack([u_w1[:, :, k] for k in range(KERNEL1)]
                   + [u_w2[:, :, k] for k in range(KERNEL2)]).astype(jnp.float32)  # (8, C, C)
    zc = jnp.zeros((C,), jnp.float32)
    bias = jnp.stack([jnp.concatenate([phi_b1, psi_b1]),
                      jnp.concatenate([phi_b2, psi_b2]),
                      jnp.concatenate([u_b1, zc]),
                      jnp.concatenate([u_b2, zc])], axis=1).astype(jnp.float32)    # (2C, 4)
    local_idx = jnp.asarray(
        (np.arange(BLOCK_W, dtype=np.int32) % Lp).reshape(1, BLOCK_W))             # (1, BW)

    # ---- input layout plumbing (all in XLA, outside the kernel) ----
    # channels-first, x1/x2 stacked on sublanes, replication pad done once here,
    # batch folded along lanes with stride Lp, lane width padded to a 128 multiple.
    x12 = jnp.concatenate([jnp.transpose(x1, (0, 2, 1)),
                           jnp.transpose(x2, (0, 2, 1))], axis=1).astype(jnp.float32)
    x12 = jnp.pad(x12, ((0, Bp - B), (0, 0), (0, 0)))                  # pad batch
    x12 = jnp.pad(x12, ((0, 0), (0, 0), (PAD, PAD)), mode="edge")      # (Bp, 2C, Lp)
    x12 = x12.reshape(n_blocks, TB, 2 * C, Lp).transpose(0, 2, 1, 3)
    x12 = x12.reshape(n_blocks, 2 * C, TB * Lp)
    x12 = jnp.pad(x12, ((0, 0), (0, 0), (0, BLOCK_W - TB * Lp)))
    x12 = x12.transpose(1, 0, 2).reshape(2 * C, n_blocks * BLOCK_W)    # (2C, nb*BW)

    # generous per-block VMEM budget (inputs+outputs+live slabs, double-buffered)
    vmem_limit = int(min(64 * 1024 * 1024,
                         max(8 * 1024 * 1024, 32 * (3 * C) * BLOCK_W * 4)))

    kernel = functools.partial(_interactor_kernel, L=L)
    out = pl.pallas_call(
        kernel,
        out_shape=jax.ShapeDtypeStruct((C, n_blocks * BLOCK_W), jnp.float32),
        grid=(n_blocks,),
        in_specs=[
            pl.BlockSpec((2 * C, BLOCK_W), lambda i: (0, i)),
            pl.BlockSpec((NTAPS, 2 * C, 2 * C), lambda i: (0, 0, 0)),
            pl.BlockSpec((NTAPS, C, C), lambda i: (0, 0, 0)),
            pl.BlockSpec((2 * C, 4), lambda i: (0, 0)),
            pl.BlockSpec((1, BLOCK_W), lambda i: (0, 0)),
        ],
        out_specs=pl.BlockSpec((C, BLOCK_W), lambda i: (0, i)),
        compiler_params=pltpu.CompilerParams(
            dimension_semantics=("parallel",),
            vmem_limit_bytes=vmem_limit),
    )(x12, wps, wu, bias, local_idx)

    # unfold: (C, nb*BW) -> (B, C, L); valid output sits at local cols [0, L) per element
    out = out.reshape(C, n_blocks, BLOCK_W)[:, :, :TB * Lp]
    out = out.reshape(C, Bp, Lp)[:, :B, :L]
    return jnp.transpose(out, (1, 0, 2))       # (B, C, L), same layout the module returns


# ----------------------- pure-JAX reference (for checking) -----------------------
def _branch_ref(x, p):
    w1, b1, w2, b2 = p
    B, L, C = x.shape
    xp = jnp.pad(x, ((0, 0), (PAD, PAD), (0, 0)), mode="edge")
    L1 = L + 2 * PAD - KERNEL1 + 1
    h = jnp.zeros((B, L1, w1.shape[0]), jnp.float32)
    for k in range(KERNEL1):
        h = h + jnp.einsum("blc,oc->blo", xp[:, k:k + L1, :], w1[:, :, k])
    h = h + b1
    h = jnp.where(h > 0, h, 0.01 * h)
    y = jnp.zeros((B, L, w2.shape[0]), jnp.float32)
    for k in range(KERNEL2):
        y = y + jnp.einsum("blc,oc->blo", h[:, k:k + L, :], w2[:, :, k])
    y = y + b2
    return jnp.tanh(y)


def interactor_generate_ref(x1, x2, phi_p, psi_p, u_p):
    d = x2 * jnp.exp(_branch_ref(x1, phi_p))
    c = x1 * jnp.exp(_branch_ref(x2, psi_p))
    out = c + _branch_ref(d, u_p)
    return jnp.transpose(out, (0, 2, 1))


# ----------------------- deterministic parameter init -----------------------
def _conv_params(key, cout, cin, k):
    k1, k2 = jax.random.split(key)
    bound = 1.0 / math.sqrt(cin * k)
    w = jax.random.uniform(k1, (cout, cin, k), jnp.float32, -bound, bound)
    b = jax.random.uniform(k2, (cout,), jnp.float32, -bound, bound)
    return w, b


def _branch_params(key, c):
    k1, k2 = jax.random.split(key)
    w1, b1 = _conv_params(k1, c, c, KERNEL1)   # hidden_size = 1 -> hidden channels = C
    w2, b2 = _conv_params(k2, c, c, KERNEL2)
    return (w1, b1, w2, b2)


if __name__ == "__main__":
    B, L, C = 2, 16, 4  # batch, sequence length, in_planes

    key = jax.random.PRNGKey(0)
    kx1, kx2, kphi, kpsi, ku = jax.random.split(key, 5)

    x1 = jax.random.normal(kx1, (B, L, C), jnp.float32)
    x2 = jax.random.normal(kx2, (B, L, C), jnp.float32)

    phi_p = _branch_params(kphi, C)
    psi_p = _branch_params(kpsi, C)
    u_p = _branch_params(ku, C)

    out = jax.block_until_ready(interactor_generate(x1, x2, phi_p, psi_p, u_p))
    ref = jax.block_until_ready(interactor_generate_ref(x1, x2, phi_p, psi_p, u_p))

    assert out.shape == (B, C, L), out.shape
    np.testing.assert_allclose(np.asarray(out), np.asarray(ref), rtol=1e-3, atol=1e-3)

    print("KERNEL_OK")
</pallas_src>

<mosaic_0001>
module attributes {stable_mosaic.version = 11 : i64} {
  func.func @_interactor_kernel(%arg0: i32, %arg1: memref<8x128xf32, #tpu.memory_space<vmem>>, %arg2: memref<8x8x8xf32, #tpu.memory_space<vmem>>, %arg3: memref<8x4x4xf32, #tpu.memory_space<vmem>>, %arg4: memref<8x4xf32, #tpu.memory_space<vmem>>, %arg5: memref<1x128xi32, #tpu.memory_space<vmem>>, %arg6: memref<4x128xf32, #tpu.memory_space<vmem>>) attributes {dimension_semantics = [#tpu.dimension_semantics<parallel>], iteration_bounds = array<i64: 1>, scalar_prefetch = 0 : i64, scratch_operands = 0 : i64, tpu.core_type = #tpu.core_type<tc>, window_params = [{transform_indices = @transform_0, window_bounds = array<i64: 8, 128>}, {pipeline_mode = #tpu.pipeline_mode<synchronous>, transform_indices = @transform_1, window_bounds = array<i64: 8, 8, 8>}, {pipeline_mode = #tpu.pipeline_mode<synchronous>, transform_indices = @transform_2, window_bounds = array<i64: 8, 4, 4>}, {pipeline_mode = #tpu.pipeline_mode<synchronous>, transform_indices = @transform_3, window_bounds = array<i64: 8, 4>}, {pipeline_mode = #tpu.pipeline_mode<synchronous>, transform_indices = @transform_4, window_bounds = array<i64: 1, 128>}, {transform_indices = @transform_5, window_bounds = array<i64: 4, 128>}]} {
    %c0 = arith.constant 0 : index
    %c0_0 = arith.constant 0 : index
    %0 = vector.load %arg1[%c0, %c0_0] : memref<8x128xf32, #tpu.memory_space<vmem>>, vector<8x128xf32>
    %c0_1 = arith.constant 0 : index
    %c0_2 = arith.constant 0 : index
    %1 = vector.load %arg4[%c0_1, %c0_2] : memref<8x4xf32, #tpu.memory_space<vmem>>, vector<8x1xf32>
    %c0_3 = arith.constant 0 : index
    %c1 = arith.constant 1 : index
    %2 = vector.load %arg4[%c0_3, %c1] : memref<8x4xf32, #tpu.memory_space<vmem>>, vector<8x1xf32>
    %c0_4 = arith.constant 0 : index
    %c2 = arith.constant 2 : index
    %3 = vector.load %arg4[%c0_4, %c2] : memref<8x4xf32, #tpu.memory_space<vmem>>, vector<4x1xf32>
    %c0_5 = arith.constant 0 : index
    %c3 = arith.constant 3 : index
    %4 = vector.load %arg4[%c0_5, %c3] : memref<8x4xf32, #tpu.memory_space<vmem>>, vector<4x1xf32>
    %c0_6 = arith.constant 0 : index
    %c0_7 = arith.constant 0 : index
    %5 = vector.load %arg5[%c0_6, %c0_7] : memref<1x128xi32, #tpu.memory_space<vmem>>, vector<1x128xi32>
    %c0_8 = arith.constant 0 : index
    %c0_9 = arith.constant 0 : index
    %c0_10 = arith.constant 0 : index
    %6 = vector.load %arg2[%c0_8, %c0_9, %c0_10] : memref<8x8x8xf32, #tpu.memory_space<vmem>>, vector<1x8x8xf32>
    %7 = vector.shape_cast %6 : vector<1x8x8xf32> to vector<8x8xf32>
    %cst = arith.constant dense<0.000000e+00> : vector<8x128xf32>
    %8 = tpu.matmul %7, %0, %cst {dimension_numbers = #tpu.dot_dimension_numbers<[1], [0], [0], [1], [0, 0, 1, 1], [], []>} : vector<8x8xf32>, vector<8x128xf32>, vector<8x128xf32> -> vector<8x128xf32>
    %c1_11 = arith.constant 1 : index
    %c0_12 = arith.constant 0 : index
    %c0_13 = arith.constant 0 : index
    %9 = vector.load %arg2[%c1_11, %c0_12, %c0_13] : memref<8x8x8xf32, #tpu.memory_space<vmem>>, vector<1x8x8xf32>
    %10 = vector.shape_cast %9 : vector<1x8x8xf32> to vector<8x8xf32>
    %c127_i32 = arith.constant 127 : i32
    %11 = tpu.dynamic_rotate %0 by %c127_i32 dim 1 : vector<8x128xf32>, i32 -> vector<8x128xf32>
    %cst_14 = arith.constant dense<0.000000e+00> : vector<8x128xf32>
    %12 = tpu.matmul %10, %11, %cst_14 {dimension_numbers = #tpu.dot_dimension_numbers<[1], [0], [0], [1], [0, 0, 1, 1], [], []>} : vector<8x8xf32>, vector<8x128xf32>, vector<8x128xf32> -> vector<8x128xf32>
    %13 = arith.addf %8, %12 : vector<8x128xf32>
    %c2_15 = arith.constant 2 : index
    %c0_16 = arith.constant 0 : index
    %c0_17 = arith.constant 0 : index
    %14 = vector.load %arg2[%c2_15, %c0_16, %c0_17] : memref<8x8x8xf32, #tpu.memory_space<vmem>>, vector<1x8x8xf32>
    %15 = vector.shape_cast %14 : vector<1x8x8xf32> to vector<8x8xf32>
    %c126_i32 = arith.constant 126 : i32
    %16 = tpu.dynamic_rotate %0 by %c126_i32 dim 1 : vector<8x128xf32>, i32 -> vector<8x128xf32>
    %cst_18 = arith.constant dense<0.000000e+00> : vector<8x128xf32>
    %17 = tpu.matmul %15, %16, %cst_18 {dimension_numbers = #tpu.dot_dimension_numbers<[1], [0], [0], [1], [0, 0, 1, 1], [], []>} : vector<8x8xf32>, vector<8x128xf32>, vector<8x128xf32> -> vector<8x128xf32>
    %18 = arith.addf %13, %17 : vector<8x128xf32>
    %c3_19 = arith.constant 3 : index
    %c0_20 = arith.constant 0 : index
    %c0_21 = arith.constant 0 : index
    %19 = vector.load %arg2[%c3_19, %c0_20, %c0_21] : memref<8x8x8xf32, #tpu.memory_space<vmem>>, vector<1x8x8xf32>
    %20 = vector.shape_cast %19 : vector<1x8x8xf32> to vector<8x8xf32>
    %c125_i32 = arith.constant 125 : i32
    %21 = tpu.dynamic_rotate %0 by %c125_i32 dim 1 : vector<8x128xf32>, i32 -> vector<8x128xf32>
    %cst_22 = arith.constant dense<0.000000e+00> : vector<8x128xf32>
    %22 = tpu.matmul %20, %21, %cst_22 {dimension_numbers = #tpu.dot_dimension_numbers<[1], [0], [0], [1], [0, 0, 1, 1], [], []>} : vector<8x8xf32>, vector<8x128xf32>, vector<8x128xf32> -> vector<8x128xf32>
    %23 = arith.addf %18, %22 : vector<8x128xf32>
    %c4 = arith.constant 4 : index
    %c0_23 = arith.constant 0 : index
    %c0_24 = arith.constant 0 : index
    %24 = vector.load %arg2[%c4, %c0_23, %c0_24] : memref<8x8x8xf32, #tpu.memory_space<vmem>>, vector<1x8x8xf32>
    %25 = vector.shape_cast %24 : vector<1x8x8xf32> to vector<8x8xf32>
    %c124_i32 = arith.constant 124 : i32
    %26 = tpu.dynamic_rotate %0 by %c124_i32 dim 1 : vector<8x128xf32>, i32 -> vector<8x128xf32>
    %cst_25 = arith.constant dense<0.000000e+00> : vector<8x128xf32>
    %27 = tpu.matmul %25, %26, %cst_25 {dimension_numbers = #tpu.dot_dimension_numbers<[1], [0], [0], [1], [0, 0, 1, 1], [], []>} : vector<8x8xf32>, vector<8x128xf32>, vector<8x128xf32> -> vector<8x128xf32>
    %28 = arith.addf %23, %27 : vector<8x128xf32>
    %29 = vector.broadcast %1 : vector<8x1xf32> to vector<8x128xf32>
    %30 = arith.addf %28, %29 : vector<8x128xf32>
    %cst_26 = arith.constant 0.000000e+00 : f32
    %31 = vector.broadcast %cst_26 : f32 to vector<8x128xf32>
    %32 = arith.cmpf ogt, %30, %31 : vector<8x128xf32>
    %cst_27 = arith.constant 0.00999999977 : f32
    %33 = vector.broadcast %cst_27 : f32 to vector<8x128xf32>
    %34 = arith.mulf %33, %30 : vector<8x128xf32>
    %35 = arith.select %32, %30, %34 : vector<8x128xi1>, vector<8x128xf32>
    %c5 = arith.constant 5 : index
    %c0_28 = arith.constant 0 : index
    %c0_29 = arith.constant 0 : index
    %36 = vector.load %arg2[%c5, %c0_28, %c0_29] : memref<8x8x8xf32, #tpu.memory_space<vmem>>, vector<1x8x8xf32>
    %37 = vector.shape_cast %36 : vector<1x8x8xf32> to vector<8x8xf32>
    %cst_30 = arith.constant dense<0.000000e+00> : vector<8x128xf32>
    %38 = tpu.matmul %37, %35, %cst_30 {dimension_numbers = #tpu.dot_dimension_numbers<[1], [0], [0], [1], [0, 0, 1, 1], [], []>} : vector<8x8xf32>, vector<8x128xf32>, vector<8x128xf32> -> vector<8x128xf32>
    %c6 = arith.constant 6 : index
    %c0_31 = arith.constant 0 : index
    %c0_32 = arith.constant 0 : index
    %39 = vector.load %arg2[%c6, %c0_31, %c0_32] : memref<8x8x8xf32, #tpu.memory_space<vmem>>, vector<1x8x8xf32>
    %40 = vector.shape_cast %39 : vector<1x8x8xf32> to vector<8x8xf32>
    %c127_i32_33 = arith.constant 127 : i32
    %41 = tpu.dynamic_rotate %35 by %c127_i32_33 dim 1 : vector<8x128xf32>, i32 -> vector<8x128xf32>
    %cst_34 = arith.constant dense<0.000000e+00> : vector<8x128xf32>
    %42 = tpu.matmul %40, %41, %cst_34 {dimension_numbers = #tpu.dot_dimension_numbers<[1], [0], [0], [1], [0, 0, 1, 1], [], []>} : vector<8x8xf32>, vector<8x128xf32>, vector<8x128xf32> -> vector<8x128xf32>
    %43 = arith.addf %38, %42 : vector<8x128xf32>
    %c7 = arith.constant 7 : index
    %c0_35 = arith.constant 0 : index
    %c0_36 = arith.constant 0 : index
    %44 = vector.load %arg2[%c7, %c0_35, %c0_36] : memref<8x8x8xf32, #tpu.memory_space<vmem>>, vector<1x8x8xf32>
    %45 = vector.shape_cast %44 : vector<1x8x8xf32> to vector<8x8xf32>
    %c126_i32_37 = arith.constant 126 : i32
    %46 = tpu.dynamic_rotate %35 by %c126_i32_37 dim 1 : vector<8x128xf32>, i32 -> vector<8x128xf32>
    %cst_38 = arith.constant dense<0.000000e+00> : vector<8x128xf32>
    %47 = tpu.matmul %45, %46, %cst_38 {dimension_numbers = #tpu.dot_dimension_numbers<[1], [0], [0], [1], [0, 0, 1, 1], [], []>} : vector<8x8xf32>, vector<8x128xf32>, vector<8x128xf32> -> vector<8x128xf32>
    %48 = arith.addf %43, %47 : vector<8x128xf32>
    %49 = vector.broadcast %2 : vector<8x1xf32> to vector<8x128xf32>
    %50 = arith.addf %48, %49 : vector<8x128xf32>
    %51 = math.tanh %50 : vector<8x128xf32>
    %c125_i32_39 = arith.constant 125 : i32
    %52 = tpu.dynamic_rotate %0 by %c125_i32_39 dim 1 : vector<8x128xf32>, i32 -> vector<8x128xf32>
    %53 = vector.extract_strided_slice %52 {offsets = [4, 0], sizes = [4, 128], strides = [1, 1]} : vector<8x128xf32> to vector<4x128xf32>
    %54 = vector.extract_strided_slice %51 {offsets = [0, 0], sizes = [4, 128], strides = [1, 1]} : vector<8x128xf32> to vector<4x128xf32>
    %55 = math.exp %54 : vector<4x128xf32>
    %56 = arith.mulf %53, %55 : vector<4x128xf32>
    %57 = vector.extract_strided_slice %52 {offsets = [0, 0], sizes = [4, 128], strides = [1, 1]} : vector<8x128xf32> to vector<4x128xf32>
    %58 = vector.extract_strided_slice %51 {offsets = [4, 0], sizes = [4, 128], strides = [1, 1]} : vector<8x128xf32> to vector<4x128xf32>
    %59 = math.exp %58 : vector<4x128xf32>
    %60 = arith.mulf %57, %59 : vector<4x128xf32>
    %c3_i32 = arith.constant 3 : i32
    %61 = tpu.dynamic_rotate %56 by %c3_i32 dim 1 : vector<4x128xf32>, i32 -> vector<4x128xf32>
    %c2_i32 = arith.constant 2 : i32
    %62 = vector.broadcast %c2_i32 : i32 to vector<1x128xi32>
    %63 = arith.cmpi eq, %5, %62 : vector<1x128xi32>
    %c127_i32_40 = arith.constant 127 : i32
    %64 = tpu.dynamic_rotate %61 by %c127_i32_40 dim 1 : vector<4x128xf32>, i32 -> vector<4x128xf32>
    %65 = vector.shape_cast %63 : vector<1x128xi1> to vector<1x128xi1>
    %66 = vector.broadcast %65 : vector<1x128xi1> to vector<4x128xi1>
    %67 = arith.select %66, %64, %61 : vector<4x128xi1>, vector<4x128xf32>
    %c19_i32 = arith.constant 19 : i32
    %68 = vector.broadcast %c19_i32 : i32 to vector<1x128xi32>
    %69 = arith.cmpi eq, %5, %68 : vector<1x128xi32>
    %c1_i32 = arith.constant 1 : i32
    %70 = tpu.dynamic_rotate %67 by %c1_i32 dim 1 : vector<4x128xf32>, i32 -> vector<4x128xf32>
    %71 = vector.shape_cast %69 : vector<1x128xi1> to vector<1x128xi1>
    %72 = vector.broadcast %71 : vector<1x128xi1> to vector<4x128xi1>
    %73 = arith.select %72, %70, %67 : vector<4x128xi1>, vector<4x128xf32>
    %c1_i32_41 = arith.constant 1 : i32
    %74 = vector.broadcast %c1_i32_41 : i32 to vector<1x128xi32>
    %75 = arith.cmpi eq, %5, %74 : vector<1x128xi32>
    %c127_i32_42 = arith.constant 127 : i32
    %76 = tpu.dynamic_rotate %73 by %c127_i32_42 dim 1 : vector<4x128xf32>, i32 -> vector<4x128xf32>
    %77 = vector.shape_cast %75 : vector<1x128xi1> to vector<1x128xi1>
    %78 = vector.broadcast %77 : vector<1x128xi1> to vector<4x128xi1>
    %79 = arith.select %78, %76, %73 : vector<4x128xi1>, vector<4x128xf32>
    %c20_i32 = arith.constant 20 : i32
    %80 = vector.broadcast %c20_i32 : i32 to vector<1x128xi32>
    %81 = arith.cmpi eq, %5, %80 : vector<1x128xi32>
    %c1_i32_43 = arith.constant 1 : i32
    %82 = tpu.dynamic_rotate %79 by %c1_i32_43 dim 1 : vector<4x128xf32>, i32 -> vector<4x128xf32>
    %83 = vector.shape_cast %81 : vector<1x128xi1> to vector<1x128xi1>
    %84 = vector.broadcast %83 : vector<1x128xi1> to vector<4x128xi1>
    %85 = arith.select %84, %82, %79 : vector<4x128xi1>, vector<4x128xf32>
    %c0_i32 = arith.constant 0 : i32
    %86 = vector.broadcast %c0_i32 : i32 to vector<1x128xi32>
    %87 = arith.cmpi eq, %5, %86 : vector<1x128xi32>
    %c127_i32_44 = arith.constant 127 : i32
    %88 = tpu.dynamic_rotate %85 by %c127_i32_44 dim 1 : vector<4x128xf32>, i32 -> vector<4x128xf32>
    %89 = vector.shape_cast %87 : vector<1x128xi1> to vector<1x128xi1>
    %90 = vector.broadcast %89 : vector<1x128xi1> to vector<4x128xi1>
    %91 = arith.select %90, %88, %85 : vector<4x128xi1>, vector<4x128xf32>
    %c21_i32 = arith.constant 21 : i32
    %92 = vector.broadcast %c21_i32 : i32 to vector<1x128xi32>
    %93 = arith.cmpi eq, %5, %92 : vector<1x128xi32>
    %c1_i32_45 = arith.constant 1 : i32
    %94 = tpu.dynamic_rotate %91 by %c1_i32_45 dim 1 : vector<4x128xf32>, i32 -> vector<4x128xf32>
    %95 = vector.shape_cast %93 : vector<1x128xi1> to vector<1x128xi1>
    %96 = vector.broadcast %95 : vector<1x128xi1> to vector<4x128xi1>
    %97 = arith.select %96, %94, %91 : vector<4x128xi1>, vector<4x128xf32>
    %c0_46 = arith.constant 0 : index
    %c0_47 = arith.constant 0 : index
    %c0_48 = arith.constant 0 : index
    %98 = vector.load %arg3[%c0_46, %c0_47, %c0_48] : memref<8x4x4xf32, #tpu.memory_space<vmem>>, vector<1x4x4xf32>
    %99 = vector.shape_cast %98 : vector<1x4x4xf32> to vector<4x4xf32>
    %cst_49 = arith.constant dense<0.000000e+00> : vector<4x128xf32>
    %100 = tpu.matmul %99, %97, %cst_49 {dimension_numbers = #tpu.dot_dimension_numbers<[1], [0], [0], [1], [0, 0, 1, 1], [], []>} : vector<4x4xf32>, vector<4x128xf32>, vector<4x128xf32> -> vector<4x128xf32>
    %c1_50 = arith.constant 1 : index
    %c0_51 = arith.constant 0 : index
    %c0_52 = arith.constant 0 : index
    %101 = vector.load %arg3[%c1_50, %c0_51, %c0_52] : memref<8x4x4xf32, #tpu.memory_space<vmem>>, vector<1x4x4xf32>
    %102 = vector.shape_cast %101 : vector<1x4x4xf32> to vector<4x4xf32>
    %c127_i32_53 = arith.constant 127 : i32
    %103 = tpu.dynamic_rotate %97 by %c127_i32_53 dim 1 : vector<4x128xf32>, i32 -> vector<4x128xf32>
    %cst_54 = arith.constant dense<0.000000e+00> : vector<4x128xf32>
    %104 = tpu.matmul %102, %103, %cst_54 {dimension_numbers = #tpu.dot_dimension_numbers<[1], [0], [0], [1], [0, 0, 1, 1], [], []>} : vector<4x4xf32>, vector<4x128xf32>, vector<4x128xf32> -> vector<4x128xf32>
    %105 = arith.addf %100, %104 : vector<4x128xf32>
    %c2_55 = arith.constant 2 : index
    %c0_56 = arith.constant 0 : index
    %c0_57 = arith.constant 0 : index
    %106 = vector.load %arg3[%c2_55, %c0_56, %c0_57] : memref<8x4x4xf32, #tpu.memory_space<vmem>>, vector<1x4x4xf32>
    %107 = vector.shape_cast %106 : vector<1x4x4xf32> to vector<4x4xf32>
    %c126_i32_58 = arith.constant 126 : i32
    %108 = tpu.dynamic_rotate %97 by %c126_i32_58 dim 1 : vector<4x128xf32>, i32 -> vector<4x128xf32>
    %cst_59 = arith.constant dense<0.000000e+00> : vector<4x128xf32>
    %109 = tpu.matmul %107, %108, %cst_59 {dimension_numbers = #tpu.dot_dimension_numbers<[1], [0], [0], [1], [0, 0, 1, 1], [], []>} : vector<4x4xf32>, vector<4x128xf32>, vector<4x128xf32> -> vector<4x128xf32>
    %110 = arith.addf %105, %109 : vector<4x128xf32>
    %c3_60 = arith.constant 3 : index
    %c0_61 = arith.constant 0 : index
    %c0_62 = arith.constant 0 : index
    %111 = vector.load %arg3[%c3_60, %c0_61, %c0_62] : memref<8x4x4xf32, #tpu.memory_space<vmem>>, vector<1x4x4xf32>
    %112 = vector.shape_cast %111 : vector<1x4x4xf32> to vector<4x4xf32>
    %c125_i32_63 = arith.constant 125 : i32
    %113 = tpu.dynamic_rotate %97 by %c125_i32_63 dim 1 : vector<4x128xf32>, i32 -> vector<4x128xf32>
    %cst_64 = arith.constant dense<0.000000e+00> : vector<4x128xf32>
    %114 = tpu.matmul %112, %113, %cst_64 {dimension_numbers = #tpu.dot_dimension_numbers<[1], [0], [0], [1], [0, 0, 1, 1], [], []>} : vector<4x4xf32>, vector<4x128xf32>, vector<4x128xf32> -> vector<4x128xf32>
    %115 = arith.addf %110, %114 : vector<4x128xf32>
    %c4_65 = arith.constant 4 : index
    %c0_66 = arith.constant 0 : index
    %c0_67 = arith.constant 0 : index
    %116 = vector.load %arg3[%c4_65, %c0_66, %c0_67] : memref<8x4x4xf32, #tpu.memory_space<vmem>>, vector<1x4x4xf32>
    %117 = vector.shape_cast %116 : vector<1x4x4xf32> to vector<4x4xf32>
    %c124_i32_68 = arith.constant 124 : i32
    %118 = tpu.dynamic_rotate %97 by %c124_i32_68 dim 1 : vector<4x128xf32>, i32 -> vector<4x128xf32>
    %cst_69 = arith.constant dense<0.000000e+00> : vector<4x128xf32>
    %119 = tpu.matmul %117, %118, %cst_69 {dimension_numbers = #tpu.dot_dimension_numbers<[1], [0], [0], [1], [0, 0, 1, 1], [], []>} : vector<4x4xf32>, vector<4x128xf32>, vector<4x128xf32> -> vector<4x128xf32>
    %120 = arith.addf %115, %119 : vector<4x128xf32>
    %121 = vector.broadcast %3 : vector<4x1xf32> to vector<4x128xf32>
    %122 = arith.addf %120, %121 : vector<4x128xf32>
    %cst_70 = arith.constant 0.000000e+00 : f32
    %123 = vector.broadcast %cst_70 : f32 to vector<4x128xf32>
    %124 = arith.cmpf ogt, %122, %123 : vector<4x128xf32>
    %cst_71 = arith.constant 0.00999999977 : f32
    %125 = vector.broadcast %cst_71 : f32 to vector<4x128xf32>
    %126 = arith.mulf %125, %122 : vector<4x128xf32>
    %127 = arith.select %124, %122, %126 : vector<4x128xi1>, vector<4x128xf32>
    %c5_72 = arith.constant 5 : index
    %c0_73 = arith.constant 0 : index
    %c0_74 = arith.constant 0 : index
    %128 = vector.load %arg3[%c5_72, %c0_73, %c0_74] : memref<8x4x4xf32, #tpu.memory_space<vmem>>, vector<1x4x4xf32>
    %129 = vector.shape_cast %128 : vector<1x4x4xf32> to vector<4x4xf32>
    %cst_75 = arith.constant dense<0.000000e+00> : vector<4x128xf32>
    %130 = tpu.matmul %129, %127, %cst_75 {dimension_numbers = #tpu.dot_dimension_numbers<[1], [0], [0], [1], [0, 0, 1, 1], [], []>} : vector<4x4xf32>, vector<4x128xf32>, vector<4x128xf32> -> vector<4x128xf32>
    %c6_76 = arith.constant 6 : index
    %c0_77 = arith.constant 0 : index
    %c0_78 = arith.constant 0 : index
    %131 = vector.load %arg3[%c6_76, %c0_77, %c0_78] : memref<8x4x4xf32, #tpu.memory_space<vmem>>, vector<1x4x4xf32>
    %132 = vector.shape_cast %131 : vector<1x4x4xf32> to vector<4x4xf32>
    %c127_i32_79 = arith.constant 127 : i32
    %133 = tpu.dynamic_rotate %127 by %c127_i32_79 dim 1 : vector<4x128xf32>, i32 -> vector<4x128xf32>
    %cst_80 = arith.constant dense<0.000000e+00> : vector<4x128xf32>
    %134 = tpu.matmul %132, %133, %cst_80 {dimension_numbers = #tpu.dot_dimension_numbers<[1], [0], [0], [1], [0, 0, 1, 1], [], []>} : vector<4x4xf32>, vector<4x128xf32>, vector<4x128xf32> -> vector<4x128xf32>
    %135 = arith.addf %130, %134 : vector<4x128xf32>
    %c7_81 = arith.constant 7 : index
    %c0_82 = arith.constant 0 : index
    %c0_83 = arith.constant 0 : index
    %136 = vector.load %arg3[%c7_81, %c0_82, %c0_83] : memref<8x4x4xf32, #tpu.memory_space<vmem>>, vector<1x4x4xf32>
    %137 = vector.shape_cast %136 : vector<1x4x4xf32> to vector<4x4xf32>
    %c126_i32_84 = arith.constant 126 : i32
    %138 = tpu.dynamic_rotate %127 by %c126_i32_84 dim 1 : vector<4x128xf32>, i32 -> vector<4x128xf32>
    %cst_85 = arith.constant dense<0.000000e+00> : vector<4x128xf32>
    %139 = tpu.matmul %137, %138, %cst_85 {dimension_numbers = #tpu.dot_dimension_numbers<[1], [0], [0], [1], [0, 0, 1, 1], [], []>} : vector<4x4xf32>, vector<4x128xf32>, vector<4x128xf32> -> vector<4x128xf32>
    %140 = arith.addf %135, %139 : vector<4x128xf32>
    %141 = vector.broadcast %4 : vector<4x1xf32> to vector<4x128xf32>
    %142 = arith.addf %140, %141 : vector<4x128xf32>
    %143 = math.tanh %142 : vector<4x128xf32>
    %144 = arith.addf %60, %143 : vector<4x128xf32>
    %c0_86 = arith.constant 0 : index
    %c0_87 = arith.constant 0 : index
    %145 = vector.load %arg6[%c0_86, %c0_87] : memref<4x128xf32, #tpu.memory_space<vmem>>, vector<4x128xf32>
    tpu.vector_store %arg6[%c0_86, %c0_87], %144 {strides = array<i32>} : memref<4x128xf32, #tpu.memory_space<vmem>>, vector<4x128xf32>,
    return
  }
  func.func @transform_0(%arg0: i32) -> (i32, i32) {
    %c0_i32 = arith.constant 0 : i32
    %c0_i32_0 = arith.constant 0 : i32
    return %c0_i32, %arg0 : i32, i32
  }
  func.func @transform_1(%arg0: i32) -> (i32, i32, i32) {
    %c0_i32 = arith.constant 0 : i32
    %c0_i32_0 = arith.constant 0 : i32
    %c0_i32_1 = arith.constant 0 : i32
    %c0_i32_2 = arith.constant 0 : i32
    return %c0_i32, %c0_i32_0, %c0_i32_1 : i32, i32, i32
  }
  func.func @transform_2(%arg0: i32) -> (i32, i32, i32) {
    %c0_i32 = arith.constant 0 : i32
    %c0_i32_0 = arith.constant 0 : i32
    %c0_i32_1 = arith.constant 0 : i32
    %c0_i32_2 = arith.constant 0 : i32
    return %c0_i32, %c0_i32_0, %c0_i32_1 : i32, i32, i32
  }
  func.func @transform_3(%arg0: i32) -> (i32, i32) {
    %c0_i32 = arith.constant 0 : i32
    %c0_i32_0 = arith.constant 0 : i32
    %c0_i32_1 = arith.constant 0 : i32
    return %c0_i32, %c0_i32_0 : i32, i32
  }
  func.func @transform_4(%arg0: i32) -> (i32, i32) {
    %c0_i32 = arith.constant 0 : i32
    %c0_i32_0 = arith.constant 0 : i32
    %c0_i32_1 = arith.constant 0 : i32
    return %c0_i32, %c0_i32_0 : i32, i32
  }
  func.func @transform_5(%arg0: i32) -> (i32, i32) {
    %c0_i32 = arith.constant 0 : i32
    %c0_i32_0 = arith.constant 0 : i32
    return %c0_i32, %arg0 : i32, i32
  }
}

</mosaic_0001>

<llo_original>
// kernel: interactor_generate.1
$region0: #{interactor_generate.1}
  #allocation0 [shape = 'u32[]', space=smem, size = 0x4, offset = 0x4, fixed_abs, tag = 'smem constant byte address 0x4 - core index']
  #allocation1 [shape = 'u32[144,128]{1,0:T(1,128)}', space=vmem, size = 0x12000, scoped, tag = 'internal scratch']
  %s0 = inlined_call_operand.vmem [shape: f32[8,128], index: 0, kind: input, shape index: {}]
  %s1 = inlined_call_operand.vmem [shape: f32[8,8,8], index: 1, kind: input, shape index: {}]
  %s2 = inlined_call_operand.vmem [shape: f32[8,4,4], index: 2, kind: input, shape index: {}]
  %s3 = inlined_call_operand.vmem [shape: f32[8,4], index: 3, kind: input, shape index: {}]
  %s4 = inlined_call_operand.vmem [shape: s32[1,128], index: 4, kind: input, shape index: {}]
  %s5 = inlined_call_operand.vmem [shape: f32[4,128], index: 5, kind: output, shape index: {}]
  %s6 = sld [smem:[#allocation0]]
  $region30: #{interactor_generate.1} parent=0
    _
  %s8 = ssub.s32 1, %s6
  %s9 = scalar_select 0, %s8, %s6
  // Predicated region
  $region2: #{interactor_generate.1} parent=0 // pred_check
    _
  $region3: #{interactor_generate.1} parent=0 // pred_check_branch
    %11 = sbr.rel (0) target = $region5
  $region4: #{interactor_generate.1} parent=0 // pred_region
    _
  $region5: #{interactor_generate.1} parent=0 // pred_fallthru
    _
  // Predicated region
  $region6: #{interactor_generate.1} parent=0 // pred_check
    _
  $region7: #{interactor_generate.1} parent=0 // pred_check_branch
    %13 = sbr.rel (0) target = $region9
  $region8: #{interactor_generate.1} parent=0 // pred_region
    _
  $region9: #{interactor_generate.1} parent=0 // pred_fallthru
    _
  // Predicated region
  $region10: #{interactor_generate.1} parent=0 // pred_check
    _
  $region11: #{interactor_generate.1} parent=0 // pred_check_branch
    %15 = sbr.rel (0) target = $region13
  $region12: #{interactor_generate.1} parent=0 // pred_region
    _
  $region13: #{interactor_generate.1} parent=0 // pred_fallthru
    _
  // Predicated region
  $region14: #{interactor_generate.1} parent=0 // pred_check
    _
  $region15: #{interactor_generate.1} parent=0 // pred_check_branch
    %17 = sbr.rel (0) target = $region17
  $region16: #{interactor_generate.1} parent=0 // pred_region
    _
  $region17: #{interactor_generate.1} parent=0 // pred_fallthru
    _
  // Predicated region
  $region18: #{interactor_generate.1} parent=0 // pred_check
    _
  $region19: #{interactor_generate.1} parent=0 // pred_check_branch
    %19 = sbr.rel (0) target = $region21
  $region20: #{interactor_generate.1} parent=0 // pred_region
    _
  $region21: #{interactor_generate.1} parent=0 // pred_fallthru
    _
  %v20 = vld [vmem:[%s0] sm:$0xff]
  %v21 = vld [vmem:[%s3] sm:$0xff]
  %v22 = vld [vmem:[%s3] sm:$0xf]
  %v23 = vld [vmem:[%s4] sm:$0x1]
  %v24 = vld [vmem:[%s1] sm:$0xff]
  %s25 = scalar_lea.vmem %s1, 8
  %v26 = vld [vmem:[%s25] sm:$0xff]
  %27 = vrot.lane.b32.xlu0 %v20, 127
  %v28 = vpop.permute.xlu0 %27
  %vm29 = vcmask 64512
  %v31 = vsel %vm29, %v26, 0
  %33 = vmatprep.subr.mxu0 0.0
  %34 = vmatpush1.msra.mxu0 0.0
  %35 = vmatprep.subr.mxu0 0.0
  %36 = vmatpush1.msra.mxu0 0.0
  %37 = vmatprep.subr.mxu0 0.0
  %38 = vmatpush1.msra.mxu0 0.0
  %39 = vmatprep.subr.mxu0 0.0
  %40 = vmatpush1.msra.mxu0 0.0
  %41 = vmatprep.subr.mxu0 0.0
  %42 = vmatpush1.msra.mxu0 0.0
  %43 = vmatprep.subr.mxu0 0.0
  %44 = vmatpush1.msra.mxu0 0.0
  %45 = vmatprep.subr.mxu0 0.0
  %46 = vmatpush1.msra.mxu0 0.0
  %47 = vmatprep.subr.mxu0 0.0
  %48 = vmatpush1.msra.mxu0 0.0
  %49 = vmatprep.subr.mxu0 0.0
  %50 = vmatpush1.msra.mxu0 0.0
  %51 = vmatprep.subr.mxu0 0.0
  %52 = vmatpush1.msra.mxu0 0.0
  %53 = vmatprep.subr.mxu0 0.0
  %54 = vmatpush1.msra.mxu0 0.0
  %55 = vmatprep.subr.mxu0 0.0
  %56 = vmatpush1.msra.mxu0 0.0
  %57 = vmatprep.subr.mxu0 0.0
  %58 = vmatpush1.msra.mxu0 0.0
  %59 = vmatprep.subr.mxu0 0.0
  %60 = vmatpush1.msra.mxu0 0.0
  %61 = vmatprep.subr.mxu0 0.0
  %62 = vmatpush1.msra.mxu0 0.0
  %63 = vmatprep.subr.mxu0 0.0
  %64 = vmatpush1.msra.mxu0 %v28
  %65 = vmatprep.subr.mxu0 0.0
  %66 = vmatpush2.msra.mxu0 0.0
  %67 = vmatprep.subr.mxu0 0.0
  %68 = vmatpush2.msra.mxu0 0.0
  %69 = vmatprep.subr.mxu0 0.0
  %70 = vmatpush2.msra.mxu0 0.0
  %71 = vmatprep.subr.mxu0 0.0
  %72 = vmatpush2.msra.mxu0 0.0
  %73 = vmatprep.subr.mxu0 0.0
  %74 = vmatpush2.msra.mxu0 0.0
  %75 = vmatprep.subr.mxu0 0.0
  %76 = vmatpush2.msra.mxu0 0.0
  %77 = vmatprep.subr.mxu0 0.0
  %78 = vmatpush2.msra.mxu0 0.0
  %79 = vmatprep.subr.mxu0 0.0
  %80 = vmatpush2.msra.mxu0 0.0
  %81 = vmatprep.subr.mxu0 0.0
  %82 = vmatpush2.msra.mxu0 0.0
  %83 = vmatprep.subr.mxu0 0.0
  %84 = vmatpush2.msra.mxu0 0.0
  %85 = vmatprep.subr.mxu0 0.0
  %86 = vmatpush2.msra.mxu0 0.0
  %87 = vmatprep.subr.mxu0 0.0
  %88 = vmatpush2.msra.mxu0 0.0
  %89 = vmatprep.subr.mxu0 0.0
  %90 = vmatpush2.msra.mxu0 0.0
  %91 = vmatprep.subr.mxu0 0.0
  %92 = vmatpush2.msra.mxu0 0.0
  %93 = vmatprep.subr.mxu0 0.0
  %94 = vmatpush2.msra.mxu0 0.0
  %95 = vmatprep.subr.mxu0 0.0
  %96 = vmatpush2.msra.mxu0 0.0
  %97 = vmatprep.mubr.f32.mxu0 0.0
  %98 = vmatmul.mubr.f32.gmra.mxu0 %v31
  %v99 = vpop.f32.mrf.mxu0
  %v100 = vadd.f32 0.0, %v99
  %v101 = vpop.f32.mrf.mxu0
  %102 = vdwg.mxu0
  %v104 = vsel %vm29, %v24, 0
  %106 = vmatprep.subr.mxu0 0.0
  %107 = vmatpush1.msra.mxu0 0.0
  %108 = vmatprep.subr.mxu0 0.0
  %109 = vmatpush1.msra.mxu0 0.0
  %110 = vmatprep.subr.mxu0 0.0
  %111 = vmatpush1.msra.mxu0 0.0
  %112 = vmatprep.subr.mxu0 0.0
  %113 = vmatpush1.msra.mxu0 0.0
  %114 = vmatprep.subr.mxu0 0.0
  %115 = vmatpush1.msra.mxu0 0.0
  %116 = vmatprep.subr.mxu0 0.0
  %117 = vmatpush1.msra.mxu0 0.0
  %118 = vmatprep.subr.mxu0 0.0
  %119 = vmatpush1.msra.mxu0 0.0
  %120 = vmatprep.subr.mxu0 0.0
  %121 = vmatpush1.msra.mxu0 0.0
  %122 = vmatprep.subr.mxu0 0.0
  %123 = vmatpush1.msra.mxu0 0.0
  %124 = vmatprep.subr.mxu0 0.0
  %125 = vmatpush1.msra.mxu0 0.0
  %126 = vmatprep.subr.mxu0 0.0
  %127 = vmatpush1.msra.mxu0 0.0
  %128 = vmatprep.subr.mxu0 0.0
  %129 = vmatpush1.msra.mxu0 0.0
  %130 = vmatprep.subr.mxu0 0.0
  %131 = vmatpush1.msra.mxu0 0.0
  %132 = vmatprep.subr.mxu0 0.0
  %133 = vmatpush1.msra.mxu0 0.0
  %134 = vmatprep.subr.mxu0 0.0
  %135 = vmatpush1.msra.mxu0 0.0
  %136 = vmatprep.subr.mxu0 0.0
  %137 = vmatpush1.msra.mxu0 %v20
  %138 = vmatprep.subr.mxu0 0.0
  %139 = vmatpush2.msra.mxu0 0.0
  %140 = vmatprep.subr.mxu0 0.0
  %141 = vmatpush2.msra.mxu0 0.0
  %142 = vmatprep.subr.mxu0 0.0
  %143 = vmatpush2.msra.mxu0 0.0
  %144 = vmatprep.subr.mxu0 0.0
  %145 = vmatpush2.msra.mxu0 0.0
  %146 = vmatprep.subr.mxu0 0.0
  %147 = vmatpush2.msra.mxu0 0.0
  %148 = vmatprep.subr.mxu0 0.0
  %149 = vmatpush2.msra.mxu0 0.0
  %150 = vmatprep.subr.mxu0 0.0
  %151 = vmatpush2.msra.mxu0 0.0
  %152 = vmatprep.subr.mxu0 0.0
  %153 = vmatpush2.msra.mxu0 0.0
  %154 = vmatprep.subr.mxu0 0.0
  %155 = vmatpush2.msra.mxu0 0.0
  %156 = vmatprep.subr.mxu0 0.0
  %157 = vmatpush2.msra.mxu0 0.0
  %158 = vmatprep.subr.mxu0 0.0
  %159 = vmatpush2.msra.mxu0 0.0
  %160 = vmatprep.subr.mxu0 0.0
  %161 = vmatpush2.msra.mxu0 0.0
  %162 = vmatprep.subr.mxu0 0.0
  %163 = vmatpush2.msra.mxu0 0.0
  %164 = vmatprep.subr.mxu0 0.0
  %165 = vmatpush2.msra.mxu0 0.0
  %166 = vmatprep.subr.mxu0 0.0
  %167 = vmatpush2.msra.mxu0 0.0
  %168 = vmatprep.subr.mxu0 0.0
  %169 = vmatpush2.msra.mxu0 0.0
  %170 = vmatprep.mubr.f32.mxu0 0.0
  %171 = vmatmul.mubr.f32.gmra.mxu0 %v104
  %v172 = vpop.f32.mrf.mxu0
  %v173 = vadd.f32 %v100, %v172
  %v174 = vpop.f32.mrf.mxu0
  %175 = vdwg.mxu0
  %s176 = scalar_lea.vmem %s1, 16
  %v177 = vld [vmem:[%s176] sm:$0xff]
  %178 = vrot.lane.b32.xlu0 %v20, 126
  %v179 = vpop.permute.xlu0 %178
  %v181 = vsel %vm29, %v177, 0
  %183 = vmatprep.subr.mxu0 0.0
  %184 = vmatpush1.msra.mxu0 0.0
  %185 = vmatprep.subr.mxu0 0.0
  %186 = vmatpush1.msra.mxu0 0.0
  %187 = vmatprep.subr.mxu0 0.0
  %188 = vmatpush1.msra.mxu0 0.0
  %189 = vmatprep.subr.mxu0 0.0
  %190 = vmatpush1.msra.mxu0 0.0
  %191 = vmatprep.subr.mxu0 0.0
  %192 = vmatpush1.msra.mxu0 0.0
  %193 = vmatprep.subr.mxu0 0.0
  %194 = vmatpush1.msra.mxu0 0.0
  %195 = vmatprep.subr.mxu0 0.0
  %196 = vmatpush1.msra.mxu0 0.0
  %197 = vmatprep.subr.mxu0 0.0
  %198 = vmatpush1.msra.mxu0 0.0
  %199 = vmatprep.subr.mxu0 0.0
  %200 = vmatpush1.msra.mxu0 0.0
  %201 = vmatprep.subr.mxu0 0.0
  %202 = vmatpush1.msra.mxu0 0.0
  %203 = vmatprep.subr.mxu0 0.0
  %204 = vmatpush1.msra.mxu0 0.0
  %205 = vmatprep.subr.mxu0 0.0
  %206 = vmatpush1.msra.mxu0 0.0
  %207 = vmatprep.subr.mxu0 0.0
  %208 = vmatpush1.msra.mxu0 0.0
  %209 = vmatprep.subr.mxu0 0.0
  %210 = vmatpush1.msra.mxu0 0.0
  %211 = vmatprep.subr.mxu0 0.0
  %212 = vmatpush1.msra.mxu0 0.0
  %213 = vmatprep.subr.mxu0 0.0
  %214 = vmatpush1.msra.mxu0 %v179
  %215 = vmatprep.subr.mxu0 0.0
  %216 = vmatpush2.msra.mxu0 0.0
  %217 = vmatprep.subr.mxu0 0.0
  %218 = vmatpush2.msra.mxu0 0.0
  %219 = vmatprep.subr.mxu0 0.0
  %220 = vmatpush2.msra.mxu0 0.0
  %221 = vmatprep.subr.mxu0 0.0
  %222 = vmatpush2.msra.mxu0 0.0
  %223 = vmatprep.subr.mxu0 0.0
  %224 = vmatpush2.msra.mxu0 0.0
  %225 = vmatprep.subr.mxu0 0.0
  %226 = vmatpush2.msra.mxu0 0.0
  %227 = vmatprep.subr.mxu0 0.0
  %228 = vmatpush2.msra.mxu0 0.0
  %229 = vmatprep.subr.mxu0 0.0
  %230 = vmatpush2.msra.mxu0 0.0
  %231 = vmatprep.subr.mxu0 0.0
  %232 = vmatpush2.msra.mxu0 0.0
  %233 = vmatprep.subr.mxu0 0.0
  %234 = vmatpush2.msra.mxu0 0.0
  %235 = vmatprep.subr.mxu0 0.0
  %236 = vmatpush2.msra.mxu0 0.0
  %237 = vmatprep.subr.mxu0 0.0
  %238 = vmatpush2.msra.mxu0 0.0
  %239 = vmatprep.subr.mxu0 0.0
  %240 = vmatpush2.msra.mxu0 0.0
  %241 = vmatprep.subr.mxu0 0.0
  %242 = vmatpush2.msra.mxu0 0.0
  %243 = vmatprep.subr.mxu0 0.0
  %244 = vmatpush2.msra.mxu0 0.0
  %245 = vmatprep.subr.mxu0 0.0
  %246 = vmatpush2.msra.mxu0 0.0
  %247 = vmatprep.mubr.f32.mxu0 0.0
  %248 = vmatmul.mubr.f32.gmra.mxu0 %v181
  %v249 = vpop.f32.mrf.mxu0
  %v250 = vadd.f32 0.0, %v249
  %v251 = vpop.f32.mrf.mxu0
  %252 = vdwg.mxu0
  %v253 = vadd.f32 %v173, %v250
  %s254 = scalar_lea.vmem %s1, 24
  %v255 = vld [vmem:[%s254] sm:$0xff]
  %256 = vrot.lane.b32.xlu0 %v20, 125
  %v257 = vpop.permute.xlu0 %256
  %v259 = vsel %vm29, %v255, 0
  %261 = vmatprep.subr.mxu0 0.0
  %262 = vmatpush1.msra.mxu0 0.0
  %263 = vmatprep.subr.mxu0 0.0
  %264 = vmatpush1.msra.mxu0 0.0
  %265 = vmatprep.subr.mxu0 0.0
  %266 = vmatpush1.msra.mxu0 0.0
  %267 = vmatprep.subr.mxu0 0.0
  %268 = vmatpush1.msra.mxu0 0.0
  %269 = vmatprep.subr.mxu0 0.0
  %270 = vmatpush1.msra.mxu0 0.0
  %271 = vmatprep.subr.mxu0 0.0
  %272 = vmatpush1.msra.mxu0 0.0
  %273 = vmatprep.subr.mxu0 0.0
  %274 = vmatpush1.msra.mxu0 0.0
  %275 = vmatprep.subr.mxu0 0.0
  %276 = vmatpush1.msra.mxu0 0.0
  %277 = vmatprep.subr.mxu0 0.0
  %278 = vmatpush1.msra.mxu0 0.0
  %279 = vmatprep.subr.mxu0 0.0
  %280 = vmatpush1.msra.mxu0 0.0
  %281 = vmatprep.subr.mxu0 0.0
  %282 = vmatpush1.msra.mxu0 0.0
  %283 = vmatprep.subr.mxu0 0.0
  %284 = vmatpush1.msra.mxu0 0.0
  %285 = vmatprep.subr.mxu0 0.0
  %286 = vmatpush1.msra.mxu0 0.0
  %287 = vmatprep.subr.mxu0 0.0
  %288 = vmatpush1.msra.mxu0 0.0
  %289 = vmatprep.subr.mxu0 0.0
  %290 = vmatpush1.msra.mxu0 0.0
  %291 = vmatprep.subr.mxu0 0.0
  %292 = vmatpush1.msra.mxu0 %v257
  %293 = vmatprep.subr.mxu0 0.0
  %294 = vmatpush2.msra.mxu0 0.0
  %295 = vmatprep.subr.mxu0 0.0
  %296 = vmatpush2.msra.mxu0 0.0
  %297 = vmatprep.subr.mxu0 0.0
  %298 = vmatpush2.msra.mxu0 0.0
  %299 = vmatprep.subr.mxu0 0.0
  %300 = vmatpush2.msra.mxu0 0.0
  %301 = vmatprep.subr.mxu0 0.0
  %302 = vmatpush2.msra.mxu0 0.0
  %303 = vmatprep.subr.mxu0 0.0
  %304 = vmatpush2.msra.mxu0 0.0
  %305 = vmatprep.subr.mxu0 0.0
  %306 = vmatpush2.msra.mxu0 0.0
  %307 = vmatprep.subr.mxu0 0.0
  %308 = vmatpush2.msra.mxu0 0.0
  %309 = vmatprep.subr.mxu0 0.0
  %310 = vmatpush2.msra.mxu0 0.0
  %311 = vmatprep.subr.mxu0 0.0
  %312 = vmatpush2.msra.mxu0 0.0
  %313 = vmatprep.subr.mxu0 0.0
  %314 = vmatpush2.msra.mxu0 0.0
  %315 = vmatprep.subr.mxu0 0.0
  %316 = vmatpush2.msra.mxu0 0.0
  %317 = vmatprep.subr.mxu0 0.0
  %318 = vmatpush2.msra.mxu0 0.0
  %319 = vmatprep.subr.mxu0 0.0
  %320 = vmatpush2.msra.mxu0 0.0
  %321 = vmatprep.subr.mxu0 0.0
  %322 = vmatpush2.msra.mxu0 0.0
  %323 = vmatprep.subr.mxu0 0.0
  %324 = vmatpush2.msra.mxu0 0.0
  %325 = vmatprep.mubr.f32.mxu0 0.0
  %326 = vmatmul.mubr.f32.gmra.mxu0 %v259
  %v327 = vpop.f32.mrf.mxu0
  %v328 = vadd.f32 0.0, %v327
  %v329 = vpop.f32.mrf.mxu0
  %330 = vdwg.mxu0
  %v331 = vadd.f32 %v253, %v328
  %s332 = scalar_lea.vmem %s1, 32
  %v333 = vld [vmem:[%s332] sm:$0xff]
  %334 = vrot.lane.b32.xlu0 %v20, 124
  %v335 = vpop.permute.xlu0 %334
  %v337 = vsel %vm29, %v333, 0
  %339 = vmatprep.subr.mxu0 0.0
  %340 = vmatpush1.msra.mxu0 0.0
  %341 = vmatprep.subr.mxu0 0.0
  %342 = vmatpush1.msra.mxu0 0.0
  %343 = vmatprep.subr.mxu0 0.0
  %344 = vmatpush1.msra.mxu0 0.0
  %345 = vmatprep.subr.mxu0 0.0
  %346 = vmatpush1.msra.mxu0 0.0
  %347 = vmatprep.subr.mxu0 0.0
  %348 = vmatpush1.msra.mxu0 0.0
  %349 = vmatprep.subr.mxu0 0.0
  %350 = vmatpush1.msra.mxu0 0.0
  %351 = vmatprep.subr.mxu0 0.0
  %352 = vmatpush1.msra.mxu0 0.0
  %353 = vmatprep.subr.mxu0 0.0
  %354 = vmatpush1.msra.mxu0 0.0
  %355 = vmatprep.subr.mxu0 0.0
  %356 = vmatpush1.msra.mxu0 0.0
  %357 = vmatprep.subr.mxu0 0.0
  %358 = vmatpush1.msra.mxu0 0.0
  %359 = vmatprep.subr.mxu0 0.0
  %360 = vmatpush1.msra.mxu0 0.0
  %361 = vmatprep.subr.mxu0 0.0
  %362 = vmatpush1.msra.mxu0 0.0
  %363 = vmatprep.subr.mxu0 0.0
  %364 = vmatpush1.msra.mxu0 0.0
  %365 = vmatprep.subr.mxu0 0.0
  %366 = vmatpush1.msra.mxu0 0.0
  %367 = vmatprep.subr.mxu0 0.0
  %368 = vmatpush1.msra.mxu0 0.0
  %369 = vmatprep.subr.mxu0 0.0
  %370 = vmatpush1.msra.mxu0 %v335
  %371 = vmatprep.subr.mxu0 0.0
  %372 = vmatpush2.msra.mxu0 0.0
  %373 = vmatprep.subr.mxu0 0.0
  %374 = vmatpush2.msra.mxu0 0.0
  %375 = vmatprep.subr.mxu0 0.0
  %376 = vmatpush2.msra.mxu0 0.0
  %377 = vmatprep.subr.mxu0 0.0
  %378 = vmatpush2.msra.mxu0 0.0
  %379 = vmatprep.subr.mxu0 0.0
  %380 = vmatpush2.msra.mxu0 0.0
  %381 = vmatprep.subr.mxu0 0.0
  %382 = vmatpush2.msra.mxu0 0.0
  %383 = vmatprep.subr.mxu0 0.0
  %384 = vmatpush2.msra.mxu0 0.0
  %385 = vmatprep.subr.mxu0 0.0
  %386 = vmatpush2.msra.mxu0 0.0
  %387 = vmatprep.subr.mxu0 0.0
  %388 = vmatpush2.msra.mxu0 0.0
  %389 = vmatprep.subr.mxu0 0.0
  %390 = vmatpush2.msra.mxu0 0.0
  %391 = vmatprep.subr.mxu0 0.0
  %392 = vmatpush2.msra.mxu0 0.0
  %393 = vmatprep.subr.mxu0 0.0
  %394 = vmatpush2.msra.mxu0 0.0
  %395 = vmatprep.subr.mxu0 0.0
  %396 = vmatpush2.msra.mxu0 0.0
  %397 = vmatprep.subr.mxu0 0.0
  %398 = vmatpush2.msra.mxu0 0.0
  %399 = vmatprep.subr.mxu0 0.0
  %400 = vmatpush2.msra.mxu0 0.0
  %401 = vmatprep.subr.mxu0 0.0
  %402 = vmatpush2.msra.mxu0 0.0
  %403 = vmatprep.mubr.f32.mxu0 0.0
  %404 = vmatmul.mubr.f32.gmra.mxu0 %v337
  %v405 = vpop.f32.mrf.mxu0
  %v406 = vadd.f32 0.0, %v405
  %v407 = vpop.f32.mrf.mxu0
  %408 = vdwg.mxu0
  %v409 = vadd.f32 %v331, %v406
  %411 = vset.pattern.permute.xlu0 0
  %412 = vperm.xlu0 %411, %v21
  %v413 = vpop.permute.xlu0 %412
  %v415 = vadd.f32 %v409, %v413
  %vm416 = vcmp.gt.f32.partialorder %v415, 0.0
  %v417 = vmul.f32 %v415, 0.01
  %v418 = vsel %vm416, %v415, %v417
  %s419 = scalar_lea.vmem %s1, 40
  %v420 = vld [vmem:[%s419] sm:$0xff]
  %s421 = scalar_lea.vmem %s1, 48
  %v422 = vld [vmem:[%s421] sm:$0xff]
  %423 = vrot.lane.b32.xlu0 %v418, 127
  %v424 = vpop.permute.xlu0 %423
  %v426 = vsel %vm29, %v422, 0
  %428 = vmatprep.subr.mxu0 0.0
  %429 = vmatpush1.msra.mxu0 0.0
  %430 = vmatprep.subr.mxu0 0.0
  %431 = vmatpush1.msra.mxu0 0.0
  %432 = vmatprep.subr.mxu0 0.0
  %433 = vmatpush1.msra.mxu0 0.0
  %434 = vmatprep.subr.mxu0 0.0
  %435 = vmatpush1.msra.mxu0 0.0
  %436 = vmatprep.subr.mxu0 0.0
  %437 = vmatpush1.msra.mxu0 0.0
  %438 = vmatprep.subr.mxu0 0.0
  %439 = vmatpush1.msra.mxu0 0.0
  %440 = vmatprep.subr.mxu0 0.0
  %441 = vmatpush1.msra.mxu0 0.0
  %442 = vmatprep.subr.mxu0 0.0
  %443 = vmatpush1.msra.mxu0 0.0
  %444 = vmatprep.subr.mxu0 0.0
  %445 = vmatpush1.msra.mxu0 0.0
  %446 = vmatprep.subr.mxu0 0.0
  %447 = vmatpush1.msra.mxu0 0.0
  %448 = vmatprep.subr.mxu0 0.0
  %449 = vmatpush1.msra.mxu0 0.0
  %450 = vmatprep.subr.mxu0 0.0
  %451 = vmatpush1.msra.mxu0 0.0
  %452 = vmatprep.subr.mxu0 0.0
  %453 = vmatpush1.msra.mxu0 0.0
  %454 = vmatprep.subr.mxu0 0.0
  %455 = vmatpush1.msra.mxu0 0.0
  %456 = vmatprep.subr.mxu0 0.0
  %457 = vmatpush1.msra.mxu0 0.0
  %458 = vmatprep.subr.mxu0 0.0
  %459 = vmatpush1.msra.mxu0 %v424
  %460 = vmatprep.subr.mxu0 0.0
  %461 = vmatpush2.msra.mxu0 0.0
  %462 = vmatprep.subr.mxu0 0.0
  %463 = vmatpush2.msra.mxu0 0.0
  %464 = vmatprep.subr.mxu0 0.0
  %465 = vmatpush2.msra.mxu0 0.0
  %466 = vmatprep.subr.mxu0 0.0
  %467 = vmatpush2.msra.mxu0 0.0
  %468 = vmatprep.subr.mxu0 0.0
  %469 = vmatpush2.msra.mxu0 0.0
  %470 = vmatprep.subr.mxu0 0.0
  %471 = vmatpush2.msra.mxu0 0.0
  %472 = vmatprep.subr.mxu0 0.0
  %473 = vmatpush2.msra.mxu0 0.0
  %474 = vmatprep.subr.mxu0 0.0
  %475 = vmatpush2.msra.mxu0 0.0
  %476 = vmatprep.subr.mxu0 0.0
  %477 = vmatpush2.msra.mxu0 0.0
  %478 = vmatprep.subr.mxu0 0.0
  %479 = vmatpush2.msra.mxu0 0.0
  %480 = vmatprep.subr.mxu0 0.0
  %481 = vmatpush2.msra.mxu0 0.0
  %482 = vmatprep.subr.mxu0 0.0
  %483 = vmatpush2.msra.mxu0 0.0
  %484 = vmatprep.subr.mxu0 0.0
  %485 = vmatpush2.msra.mxu0 0.0
  %486 = vmatprep.subr.mxu0 0.0
  %487 = vmatpush2.msra.mxu0 0.0
  %488 = vmatprep.subr.mxu0 0.0
  %489 = vmatpush2.msra.mxu0 0.0
  %490 = vmatprep.subr.mxu0 0.0
  %491 = vmatpush2.msra.mxu0 0.0
  %492 = vmatprep.mubr.f32.mxu0 0.0
  %493 = vmatmul.mubr.f32.gmra.mxu0 %v426
  %v494 = vpop.f32.mrf.mxu0
  %v495 = vadd.f32 0.0, %v494
  %v496 = vpop.f32.mrf.mxu0
  %497 = vdwg.mxu0
  %v499 = vsel %vm29, %v420, 0
  %501 = vmatprep.subr.mxu0 0.0
  %502 = vmatpush1.msra.mxu0 0.0
  %503 = vmatprep.subr.mxu0 0.0
  %504 = vmatpush1.msra.mxu0 0.0
  %505 = vmatprep.subr.mxu0 0.0
  %506 = vmatpush1.msra.mxu0 0.0
  %507 = vmatprep.subr.mxu0 0.0
  %508 = vmatpush1.msra.mxu0 0.0
  %509 = vmatprep.subr.mxu0 0.0
  %510 = vmatpush1.msra.mxu0 0.0
  %511 = vmatprep.subr.mxu0 0.0
  %512 = vmatpush1.msra.mxu0 0.0
  %513 = vmatprep.subr.mxu0 0.0
  %514 = vmatpush1.msra.mxu0 0.0
  %515 = vmatprep.subr.mxu0 0.0
  %516 = vmatpush1.msra.mxu0 0.0
  %517 = vmatprep.subr.mxu0 0.0
  %518 = vmatpush1.msra.mxu0 0.0
  %519 = vmatprep.subr.mxu0 0.0
  %520 = vmatpush1.msra.mxu0 0.0
  %521 = vmatprep.subr.mxu0 0.0
  %522 = vmatpush1.msra.mxu0 0.0
  %523 = vmatprep.subr.mxu0 0.0
  %524 = vmatpush1.msra.mxu0 0.0
  %525 = vmatprep.subr.mxu0 0.0
  %526 = vmatpush1.msra.mxu0 0.0
  %527 = vmatprep.subr.mxu0 0.0
  %528 = vmatpush1.msra.mxu0 0.0
  %529 = vmatprep.subr.mxu0 0.0
  %530 = vmatpush1.msra.mxu0 0.0
  %531 = vmatprep.subr.mxu0 0.0
  %532 = vmatpush1.msra.mxu0 %v418
  %533 = vmatprep.subr.mxu0 0.0
  %534 = vmatpush2.msra.mxu0 0.0
  %535 = vmatprep.subr.mxu0 0.0
  %536 = vmatpush2.msra.mxu0 0.0
  %537 = vmatprep.subr.mxu0 0.0
  %538 = vmatpush2.msra.mxu0 0.0
  %539 = vmatprep.subr.mxu0 0.0
  %540 = vmatpush2.msra.mxu0 0.0
  %541 = vmatprep.subr.mxu0 0.0
  %542 = vmatpush2.msra.mxu0 0.0
  %543 = vmatprep.subr.mxu0 0.0
  %544 = vmatpush2.msra.mxu0 0.0
  %545 = vmatprep.subr.mxu0 0.0
  %546 = vmatpush2.msra.mxu0 0.0
  %547 = vmatprep.subr.mxu0 0.0
  %548 = vmatpush2.msra.mxu0 0.0
  %549 = vmatprep.subr.mxu0 0.0
  %550 = vmatpush2.msra.mxu0 0.0
  %551 = vmatprep.subr.mxu0 0.0
  %552 = vmatpush2.msra.mxu0 0.0
  %553 = vmatprep.subr.mxu0 0.0
  %554 = vmatpush2.msra.mxu0 0.0
  %555 = vmatprep.subr.mxu0 0.0
  %556 = vmatpush2.msra.mxu0 0.0
  %557 = vmatprep.subr.mxu0 0.0
  %558 = vmatpush2.msra.mxu0 0.0
  %559 = vmatprep.subr.mxu0 0.0
  %560 = vmatpush2.msra.mxu0 0.0
  %561 = vmatprep.subr.mxu0 0.0
  %562 = vmatpush2.msra.mxu0 0.0
  %563 = vmatprep.subr.mxu0 0.0
  %564 = vmatpush2.msra.mxu0 0.0
  %565 = vmatprep.mubr.f32.mxu0 0.0
  %566 = vmatmul.mubr.f32.gmra.mxu0 %v499
  %v567 = vpop.f32.mrf.mxu0
  %v568 = vadd.f32 %v495, %v567
  %v569 = vpop.f32.mrf.mxu0
  %570 = vdwg.mxu0
  %s571 = scalar_lea.vmem %s1, 56
  %v572 = vld [vmem:[%s571] sm:$0xff]
  %573 = vrot.lane.b32.xlu0 %v418, 126
  %v574 = vpop.permute.xlu0 %573
  %v576 = vsel %vm29, %v572, 0
  %578 = vmatprep.subr.mxu0 0.0
  %579 = vmatpush1.msra.mxu0 0.0
  %580 = vmatprep.subr.mxu0 0.0
  %581 = vmatpush1.msra.mxu0 0.0
  %582 = vmatprep.subr.mxu0 0.0
  %583 = vmatpush1.msra.mxu0 0.0
  %584 = vmatprep.subr.mxu0 0.0
  %585 = vmatpush1.msra.mxu0 0.0
  %586 = vmatprep.subr.mxu0 0.0
  %587 = vmatpush1.msra.mxu0 0.0
  %588 = vmatprep.subr.mxu0 0.0
  %589 = vmatpush1.msra.mxu0 0.0
  %590 = vmatprep.subr.mxu0 0.0
  %591 = vmatpush1.msra.mxu0 0.0
  %592 = vmatprep.subr.mxu0 0.0
  %593 = vmatpush1.msra.mxu0 0.0
  %594 = vmatprep.subr.mxu0 0.0
  %595 = vmatpush1.msra.mxu0 0.0
  %596 = vmatprep.subr.mxu0 0.0
  %597 = vmatpush1.msra.mxu0 0.0
  %598 = vmatprep.subr.mxu0 0.0
  %599 = vmatpush1.msra.mxu0 0.0
  %600 = vmatprep.subr.mxu0 0.0
  %601 = vmatpush1.msra.mxu0 0.0
  %602 = vmatprep.subr.mxu0 0.0
  %603 = vmatpush1.msra.mxu0 0.0
  %604 = vmatprep.subr.mxu0 0.0
  %605 = vmatpush1.msra.mxu0 0.0
  %606 = vmatprep.subr.mxu0 0.0
  %607 = vmatpush1.msra.mxu0 0.0
  %608 = vmatprep.subr.mxu0 0.0
  %609 = vmatpush1.msra.mxu0 %v574
  %610 = vmatprep.subr.mxu0 0.0
  %611 = vmatpush2.msra.mxu0 0.0
  %612 = vmatprep.subr.mxu0 0.0
  %613 = vmatpush2.msra.mxu0 0.0
  %614 = vmatprep.subr.mxu0 0.0
  %615 = vmatpush2.msra.mxu0 0.0
  %616 = vmatprep.subr.mxu0 0.0
  %617 = vmatpush2.msra.mxu0 0.0
  %618 = vmatprep.subr.mxu0 0.0
  %619 = vmatpush2.msra.mxu0 0.0
  %620 = vmatprep.subr.mxu0 0.0
  %621 = vmatpush2.msra.mxu0 0.0
  %622 = vmatprep.subr.mxu0 0.0
  %623 = vmatpush2.msra.mxu0 0.0
  %624 = vmatprep.subr.mxu0 0.0
  %625 = vmatpush2.msra.mxu0 0.0
  %626 = vmatprep.subr.mxu0 0.0
  %627 = vmatpush2.msra.mxu0 0.0
  %628 = vmatprep.subr.mxu0 0.0
  %629 = vmatpush2.msra.mxu0 0.0
  %630 = vmatprep.subr.mxu0 0.0
  %631 = vmatpush2.msra.mxu0 0.0
  %632 = vmatprep.subr.mxu0 0.0
  %633 = vmatpush2.msra.mxu0 0.0
  %634 = vmatprep.subr.mxu0 0.0
  %635 = vmatpush2.msra.mxu0 0.0
  %636 = vmatprep.subr.mxu0 0.0
  %637 = vmatpush2.msra.mxu0 0.0
  %638 = vmatprep.subr.mxu0 0.0
  %639 = vmatpush2.msra.mxu0 0.0
  %640 = vmatprep.subr.mxu0 0.0
  %641 = vmatpush2.msra.mxu0 0.0
  %642 = vmatprep.mubr.f32.mxu0 0.0
  %643 = vmatmul.mubr.f32.gmra.mxu0 %v576
  %v644 = vpop.f32.mrf.mxu0
  %v645 = vadd.f32 0.0, %v644
  %v646 = vpop.f32.mrf.mxu0
  %647 = vdwg.mxu0
  %v648 = vadd.f32 %v568, %v645
  %649 = vset.pattern.permute.xlu0 1
  %650 = vperm.xlu0 %649, %v21
  %v651 = vpop.permute.xlu0 %650
  %v653 = vadd.f32 %v648, %v651
  %v654 = vtanh.pop %v653
  %v655 = vmul.f32 %v654, 1.442695
  %v656 = vpow.pop %v655
  %v658 = vrot.slane %v656, 4
  %v660 = vmul.f32 %v257, %v658
  %v662 = vrot.slane %v660, 4
  %664 = vrot.lane.b32.xlu0 %v662, 3
  %v665 = vpop.permute.xlu0 %664
  %vm666 = vcmp.eq.s32.totalorder %v23, 2
  %667 = vrot.lane.b32.xlu0 %v665, 127
  %v668 = vpop.permute.xlu0 %667
  %v669 = vsel %vm666, 1, 0
  %v670 = vlaneseq
  %v671 = vshrl.u32 %v670, 7
  %v672 = vsub.s32 0, %v671
  %v673 = vrot.slane %v669, %v672
  %vm674 = vcmp.eq.s32.totalorder %v673, 1
  %v675 = vsel %vm674, %v668, %v665
  %vm676 = vcmp.eq.s32.totalorder %v23, 19
  %677 = vrot.lane.b32.xlu0 %v675, 1
  %v678 = vpop.permute.xlu0 %677
  %v679 = vsel %vm676, 1, 0
  %v680 = vlaneseq
  %v681 = vshrl.u32 %v680, 7
  %v682 = vsub.s32 0, %v681
  %v683 = vrot.slane %v679, %v682
  %vm684 = vcmp.eq.s32.totalorder %v683, 1
  %v685 = vsel %vm684, %v678, %v675
  %vm686 = vcmp.eq.s32.totalorder %v23, 1
  %687 = vrot.lane.b32.xlu0 %v685, 127
  %v688 = vpop.permute.xlu0 %687
  %v689 = vsel %vm686, 1, 0
  %v690 = vlaneseq
  %v691 = vshrl.u32 %v690, 7
  %v692 = vsub.s32 0, %v691
  %v693 = vrot.slane %v689, %v692
  %vm694 = vcmp.eq.s32.totalorder %v693, 1
  %v695 = vsel %vm694, %v688, %v685
  %vm696 = vcmp.eq.s32.totalorder %v23, 20
  %697 = vrot.lane.b32.xlu0 %v695, 1
  %v698 = vpop.permute.xlu0 %697
  %v699 = vsel %vm696, 1, 0
  %v700 = vlaneseq
  %v701 = vshrl.u32 %v700, 7
  %v702 = vsub.s32 0, %v701
  %v703 = vrot.slane %v699, %v702
  %vm704 = vcmp.eq.s32.totalorder %v703, 1
  %v705 = vsel %vm704, %v698, %v695
  %vm706 = vcmp.eq.s32.totalorder %v23, 0
  %707 = vrot.lane.b32.xlu0 %v705, 127
  %v708 = vpop.permute.xlu0 %707
  %v709 = vsel %vm706, 1, 0
  %v710 = vlaneseq
  %v711 = vshrl.u32 %v710, 7
  %v712 = vsub.s32 0, %v711
  %v713 = vrot.slane %v709, %v712
  %vm714 = vcmp.eq.s32.totalorder %v713, 1
  %v715 = vsel %vm714, %v708, %v705
  %vm716 = vcmp.eq.s32.totalorder %v23, 21
  %717 = vrot.lane.b32.xlu0 %v715, 1
  %v718 = vpop.permute.xlu0 %717
  %v719 = vsel %vm716, 1, 0
  %v720 = vlaneseq
  %v721 = vshrl.u32 %v720, 7
  %v722 = vsub.s32 0, %v721
  %v723 = vrot.slane %v719, %v722
  %vm724 = vcmp.eq.s32.totalorder %v723, 1
  %v725 = vsel %vm724, %v718, %v715
  %v726 = vld [vmem:[%s2] sm:$0xf]
  %s727 = scalar_lea.vmem %s2, 4
  %v728 = vld [vmem:[%s727] sm:$0xf]
  %729 = vrot.lane.b32.xlu0 %v725, 127
  %v730 = vpop.permute.xlu0 %729
  %vm731 = vcmask 31744
  %v733 = vsel %vm731, %v728, 0
  %vm735 = vcmask 1043456
  %v737 = vsel %vm735, %v730, 0
  %739 = vmatprep.subr.mxu0 0.0
  %740 = vmatpush1.msra.mxu0 0.0
  %741 = vmatprep.subr.mxu0 0.0
  %742 = vmatpush1.msra.mxu0 0.0
  %743 = vmatprep.subr.mxu0 0.0
  %744 = vmatpush1.msra.mxu0 0.0
  %745 = vmatprep.subr.mxu0 0.0
  %746 = vmatpush1.msra.mxu0 0.0
  %747 = vmatprep.subr.mxu0 0.0
  %748 = vmatpush1.msra.mxu0 0.0
  %749 = vmatprep.subr.mxu0 0.0
  %750 = vmatpush1.msra.mxu0 0.0
  %751 = vmatprep.subr.mxu0 0.0
  %752 = vmatpush1.msra.mxu0 0.0
  %753 = vmatprep.subr.mxu0 0.0
  %754 = vmatpush1.msra.mxu0 0.0
  %755 = vmatprep.subr.mxu0 0.0
  %756 = vmatpush1.msra.mxu0 0.0
  %757 = vmatprep.subr.mxu0 0.0
  %758 = vmatpush1.msra.mxu0 0.0
  %759 = vmatprep.subr.mxu0 0.0
  %760 = vmatpush1.msra.mxu0 0.0
  %761 = vmatprep.subr.mxu0 0.0
  %762 = vmatpush1.msra.mxu0 0.0
  %763 = vmatprep.subr.mxu0 0.0
  %764 = vmatpush1.msra.mxu0 0.0
  %765 = vmatprep.subr.mxu0 0.0
  %766 = vmatpush1.msra.mxu0 0.0
  %767 = vmatprep.subr.mxu0 0.0
  %768 = vmatpush1.msra.mxu0 0.0
  %769 = vmatprep.subr.mxu0 0.0
  %770 = vmatpush1.msra.mxu0 %v737
  %771 = vmatprep.subr.mxu0 0.0
  %772 = vmatpush2.msra.mxu0 0.0
  %773 = vmatprep.subr.mxu0 0.0
  %774 = vmatpush2.msra.mxu0 0.0
  %775 = vmatprep.subr.mxu0 0.0
  %776 = vmatpush2.msra.mxu0 0.0
  %777 = vmatprep.subr.mxu0 0.0
  %778 = vmatpush2.msra.mxu0 0.0
  %779 = vmatprep.subr.mxu0 0.0
  %780 = vmatpush2.msra.mxu0 0.0
  %781 = vmatprep.subr.mxu0 0.0
  %782 = vmatpush2.msra.mxu0 0.0
  %783 = vmatprep.subr.mxu0 0.0
  %784 = vmatpush2.msra.mxu0 0.0
  %785 = vmatprep.subr.mxu0 0.0
  %786 = vmatpush2.msra.mxu0 0.0
  %787 = vmatprep.subr.mxu0 0.0
  %788 = vmatpush2.msra.mxu0 0.0
  %789 = vmatprep.subr.mxu0 0.0
  %790 = vmatpush2.msra.mxu0 0.0
  %791 = vmatprep.subr.mxu0 0.0
  %792 = vmatpush2.msra.mxu0 0.0
  %793 = vmatprep.subr.mxu0 0.0
  %794 = vmatpush2.msra.mxu0 0.0
  %795 = vmatprep.subr.mxu0 0.0
  %796 = vmatpush2.msra.mxu0 0.0
  %797 = vmatprep.subr.mxu0 0.0
  %798 = vmatpush2.msra.mxu0 0.0
  %799 = vmatprep.subr.mxu0 0.0
  %800 = vmatpush2.msra.mxu0 0.0
  %801 = vmatprep.subr.mxu0 0.0
  %802 = vmatpush2.msra.mxu0 0.0
  %803 = vmatprep.mubr.f32.mxu0 0.0
  %804 = vmatmul.mubr.f32.gmra.mxu0 %v733
  %v805 = vpop.f32.mrf.mxu0
  %v806 = vadd.f32 0.0, %v805
  %v807 = vpop.f32.mrf.mxu0
  %808 = vdwg.mxu0
  %v810 = vsel %vm731, %v726, 0
  %v813 = vsel %vm735, %v725, 0
  %815 = vmatprep.subr.mxu0 0.0
  %816 = vmatpush1.msra.mxu0 0.0
  %817 = vmatprep.subr.mxu0 0.0
  %818 = vmatpush1.msra.mxu0 0.0
  %819 = vmatprep.subr.mxu0 0.0
  %820 = vmatpush1.msra.mxu0 0.0
  %821 = vmatprep.subr.mxu0 0.0
  %822 = vmatpush1.msra.mxu0 0.0
  %823 = vmatprep.subr.mxu0 0.0
  %824 = vmatpush1.msra.mxu0 0.0
  %825 = vmatprep.subr.mxu0 0.0
  %826 = vmatpush1.msra.mxu0 0.0
  %827 = vmatprep.subr.mxu0 0.0
  %828 = vmatpush1.msra.mxu0 0.0
  %829 = vmatprep.subr.mxu0 0.0
  %830 = vmatpush1.msra.mxu0 0.0
  %831 = vmatprep.subr.mxu0 0.0
  %832 = vmatpush1.msra.mxu0 0.0
  %833 = vmatprep.subr.mxu0 0.0
  %834 = vmatpush1.msra.mxu0 0.0
  %835 = vmatprep.subr.mxu0 0.0
  %836 = vmatpush1.msra.mxu0 0.0
  %837 = vmatprep.subr.mxu0 0.0
  %838 = vmatpush1.msra.mxu0 0.0
  %839 = vmatprep.subr.mxu0 0.0
  %840 = vmatpush1.msra.mxu0 0.0
  %841 = vmatprep.subr.mxu0 0.0
  %842 = vmatpush1.msra.mxu0 0.0
  %843 = vmatprep.subr.mxu0 0.0
  %844 = vmatpush1.msra.mxu0 0.0
  %845 = vmatprep.subr.mxu0 0.0
  %846 = vmatpush1.msra.mxu0 %v813
  %847 = vmatprep.subr.mxu0 0.0
  %848 = vmatpush2.msra.mxu0 0.0
  %849 = vmatprep.subr.mxu0 0.0
  %850 = vmatpush2.msra.mxu0 0.0
  %851 = vmatprep.subr.mxu0 0.0
  %852 = vmatpush2.msra.mxu0 0.0
  %853 = vmatprep.subr.mxu0 0.0
  %854 = vmatpush2.msra.mxu0 0.0
  %855 = vmatprep.subr.mxu0 0.0
  %856 = vmatpush2.msra.mxu0 0.0
  %857 = vmatprep.subr.mxu0 0.0
  %858 = vmatpush2.msra.mxu0 0.0
  %859 = vmatprep.subr.mxu0 0.0
  %860 = vmatpush2.msra.mxu0 0.0
  %861 = vmatprep.subr.mxu0 0.0
  %862 = vmatpush2.msra.mxu0 0.0
  %863 = vmatprep.subr.mxu0 0.0
  %864 = vmatpush2.msra.mxu0 0.0
  %865 = vmatprep.subr.mxu0 0.0
  %866 = vmatpush2.msra.mxu0 0.0
  %867 = vmatprep.subr.mxu0 0.0
  %868 = vmatpush2.msra.mxu0 0.0
  %869 = vmatprep.subr.mxu0 0.0
  %870 = vmatpush2.msra.mxu0 0.0
  %871 = vmatprep.subr.mxu0 0.0
  %872 = vmatpush2.msra.mxu0 0.0
  %873 = vmatprep.subr.mxu0 0.0
  %874 = vmatpush2.msra.mxu0 0.0
  %875 = vmatprep.subr.mxu0 0.0
  %876 = vmatpush2.msra.mxu0 0.0
  %877 = vmatprep.subr.mxu0 0.0
  %878 = vmatpush2.msra.mxu0 0.0
  %879 = vmatprep.mubr.f32.mxu0 0.0
  %880 = vmatmul.mubr.f32.gmra.mxu0 %v810
  %v881 = vpop.f32.mrf.mxu0
  %v882 = vadd.f32 %v806, %v881
  %v883 = vpop.f32.mrf.mxu0
  %884 = vdwg.mxu0
  %s885 = scalar_lea.vmem %s2, 8
  %v886 = vld [vmem:[%s885] sm:$0xf]
  %887 = vrot.lane.b32.xlu0 %v725, 126
  %v888 = vpop.permute.xlu0 %887
  %v890 = vsel %vm731, %v886, 0
  %v893 = vsel %vm735, %v888, 0
  %895 = vmatprep.subr.mxu0 0.0
  %896 = vmatpush1.msra.mxu0 0.0
  %897 = vmatprep.subr.mxu0 0.0
  %898 = vmatpush1.msra.mxu0 0.0
  %899 = vmatprep.subr.mxu0 0.0
  %900 = vmatpush1.msra.mxu0 0.0
  %901 = vmatprep.subr.mxu0 0.0
  %902 = vmatpush1.msra.mxu0 0.0
  %903 = vmatprep.subr.mxu0 0.0
  %904 = vmatpush1.msra.mxu0 0.0
  %905 = vmatprep.subr.mxu0 0.0
  %906 = vmatpush1.msra.mxu0 0.0
  %907 = vmatprep.subr.mxu0 0.0
  %908 = vmatpush1.msra.mxu0 0.0
  %909 = vmatprep.subr.mxu0 0.0
  %910 = vmatpush1.msra.mxu0 0.0
  %911 = vmatprep.subr.mxu0 0.0
  %912 = vmatpush1.msra.mxu0 0.0
  %913 = vmatprep.subr.mxu0 0.0
  %914 = vmatpush1.msra.mxu0 0.0
  %915 = vmatprep.subr.mxu0 0.0
  %916 = vmatpush1.msra.mxu0 0.0
  %917 = vmatprep.subr.mxu0 0.0
  %918 = vmatpush1.msra.mxu0 0.0
  %919 = vmatprep.subr.mxu0 0.0
  %920 = vmatpush1.msra.mxu0 0.0
  %921 = vmatprep.subr.mxu0 0.0
  %922 = vmatpush1.msra.mxu0 0.0
  %923 = vmatprep.subr.mxu0 0.0
  %924 = vmatpush1.msra.mxu0 0.0
  %925 = vmatprep.subr.mxu0 0.0
  %926 = vmatpush1.msra.mxu0 %v893
  %927 = vmatprep.subr.mxu0 0.0
  %928 = vmatpush2.msra.mxu0 0.0
  %929 = vmatprep.subr.mxu0 0.0
  %930 = vmatpush2.msra.mxu0 0.0
  %931 = vmatprep.subr.mxu0 0.0
  %932 = vmatpush2.msra.mxu0 0.0
  %933 = vmatprep.subr.mxu0 0.0
  %934 = vmatpush2.msra.mxu0 0.0
  %935 = vmatprep.subr.mxu0 0.0
  %936 = vmatpush2.msra.mxu0 0.0
  %937 = vmatprep.subr.mxu0 0.0
  %938 = vmatpush2.msra.mxu0 0.0
  %939 = vmatprep.subr.mxu0 0.0
  %940 = vmatpush2.msra.mxu0 0.0
  %941 = vmatprep.subr.mxu0 0.0
  %942 = vmatpush2.msra.mxu0 0.0
  %943 = vmatprep.subr.mxu0 0.0
  %944 = vmatpush2.msra.mxu0 0.0
  %945 = vmatprep.subr.mxu0 0.0
  %946 = vmatpush2.msra.mxu0 0.0
  %947 = vmatprep.subr.mxu0 0.0
  %948 = vmatpush2.msra.mxu0 0.0
  %949 = vmatprep.subr.mxu0 0.0
  %950 = vmatpush2.msra.mxu0 0.0
  %951 = vmatprep.subr.mxu0 0.0
  %952 = vmatpush2.msra.mxu0 0.0
  %953 = vmatprep.subr.mxu0 0.0
  %954 = vmatpush2.msra.mxu0 0.0
  %955 = vmatprep.subr.mxu0 0.0
  %956 = vmatpush2.msra.mxu0 0.0
  %957 = vmatprep.subr.mxu0 0.0
  %958 = vmatpush2.msra.mxu0 0.0
  %959 = vmatprep.mubr.f32.mxu0 0.0
  %960 = vmatmul.mubr.f32.gmra.mxu0 %v890
  %v961 = vpop.f32.mrf.mxu0
  %v962 = vadd.f32 0.0, %v961
  %v963 = vpop.f32.mrf.mxu0
  %964 = vdwg.mxu0
  %v965 = vadd.f32 %v882, %v962
  %s966 = scalar_lea.vmem %s2, 12
  %v967 = vld [vmem:[%s966] sm:$0xf]
  %968 = vrot.lane.b32.xlu0 %v725, 125
  %v969 = vpop.permute.xlu0 %968
  %v971 = vsel %vm731, %v967, 0
  %v974 = vsel %vm735, %v969, 0
  %976 = vmatprep.subr.mxu0 0.0
  %977 = vmatpush1.msra.mxu0 0.0
  %978 = vmatprep.subr.mxu0 0.0
  %979 = vmatpush1.msra.mxu0 0.0
  %980 = vmatprep.subr.mxu0 0.0
  %981 = vmatpush1.msra.mxu0 0.0
  %982 = vmatprep.subr.mxu0 0.0
  %983 = vmatpush1.msra.mxu0 0.0
  %984 = vmatprep.subr.mxu0 0.0
  %985 = vmatpush1.msra.mxu0 0.0
  %986 = vmatprep.subr.mxu0 0.0
  %987 = vmatpush1.msra.mxu0 0.0
  %988 = vmatprep.subr.mxu0 0.0
  %989 = vmatpush1.msra.mxu0 0.0
  %990 = vmatprep.subr.mxu0 0.0
  %991 = vmatpush1.msra.mxu0 0.0
  %992 = vmatprep.subr.mxu0 0.0
  %993 = vmatpush1.msra.mxu0 0.0
  %994 = vmatprep.subr.mxu0 0.0
  %995 = vmatpush1.msra.mxu0 0.0
  %996 = vmatprep.subr.mxu0 0.0
  %997 = vmatpush1.msra.mxu0 0.0
  %998 = vmatprep.subr.mxu0 0.0
  %999 = vmatpush1.msra.mxu0 0.0
  %1000 = vmatprep.subr.mxu0 0.0
  %1001 = vmatpush1.msra.mxu0 0.0
  %1002 = vmatprep.subr.mxu0 0.0
  %1003 = vmatpush1.msra.mxu0 0.0
  %1004 = vmatprep.subr.mxu0 0.0
  %1005 = vmatpush1.msra.mxu0 0.0
  %1006 = vmatprep.subr.mxu0 0.0
  %1007 = vmatpush1.msra.mxu0 %v974
  %1008 = vmatprep.subr.mxu0 0.0
  %1009 = vmatpush2.msra.mxu0 0.0
  %1010 = vmatprep.subr.mxu0 0.0
  %1011 = vmatpush2.msra.mxu0 0.0
  %1012 = vmatprep.subr.mxu0 0.0
  %1013 = vmatpush2.msra.mxu0 0.0
  %1014 = vmatprep.subr.mxu0 0.0
  %1015 = vmatpush2.msra.mxu0 0.0
  %1016 = vmatprep.subr.mxu0 0.0
  %1017 = vmatpush2.msra.mxu0 0.0
  %1018 = vmatprep.subr.mxu0 0.0
  %1019 = vmatpush2.msra.mxu0 0.0
  %1020 = vmatprep.subr.mxu0 0.0
  %1021 = vmatpush2.msra.mxu0 0.0
  %1022 = vmatprep.subr.mxu0 0.0
  %1023 = vmatpush2.msra.mxu0 0.0
  %1024 = vmatprep.subr.mxu0 0.0
  %1025 = vmatpush2.msra.mxu0 0.0
  %1026 = vmatprep.subr.mxu0 0.0
  %1027 = vmatpush2.msra.mxu0 0.0
  %1028 = vmatprep.subr.mxu0 0.0
  %1029 = vmatpush2.msra.mxu0 0.0
  %1030 = vmatprep.subr.mxu0 0.0
  %1031 = vmatpush2.msra.mxu0 0.0
  %1032 = vmatprep.subr.mxu0 0.0
  %1033 = vmatpush2.msra.mxu0 0.0
  %1034 = vmatprep.subr.mxu0 0.0
  %1035 = vmatpush2.msra.mxu0 0.0
  %1036 = vmatprep.subr.mxu0 0.0
  %1037 = vmatpush2.msra.mxu0 0.0
  %1038 = vmatprep.subr.mxu0 0.0
  %1039 = vmatpush2.msra.mxu0 0.0
  %1040 = vmatprep.mubr.f32.mxu0 0.0
  %1041 = vmatmul.mubr.f32.gmra.mxu0 %v971
  %v1042 = vpop.f32.mrf.mxu0
  %v1043 = vadd.f32 0.0, %v1042
  %v1044 = vpop.f32.mrf.mxu0
  %1045 = vdwg.mxu0
  %v1046 = vadd.f32 %v965, %v1043
  %s1047 = scalar_lea.vmem %s2, 16
  %v1048 = vld [vmem:[%s1047] sm:$0xf]
  %1049 = vrot.lane.b32.xlu0 %v725, 124
  %v1050 = vpop.permute.xlu0 %1049
  %v1052 = vsel %vm731, %v1048, 0
  %v1055 = vsel %vm735, %v1050, 0
  %1057 = vmatprep.subr.mxu0 0.0
  %1058 = vmatpush1.msra.mxu0 0.0
  %1059 = vmatprep.subr.mxu0 0.0
  %1060 = vmatpush1.msra.mxu0 0.0
  %1061 = vmatprep.subr.mxu0 0.0
  %1062 = vmatpush1.msra.mxu0 0.0
  %1063 = vmatprep.subr.mxu0 0.0
  %1064 = vmatpush1.msra.mxu0 0.0
  %1065 = vmatprep.subr.mxu0 0.0
  %1066 = vmatpush1.msra.mxu0 0.0
  %1067 = vmatprep.subr.mxu0 0.0
  %1068 = vmatpush1.msra.mxu0 0.0
  %1069 = vmatprep.subr.mxu0 0.0
  %1070 = vmatpush1.msra.mxu0 0.0
  %1071 = vmatprep.subr.mxu0 0.0
  %1072 = vmatpush1.msra.mxu0 0.0
  %1073 = vmatprep.subr.mxu0 0.0
  %1074 = vmatpush1.msra.mxu0 0.0
  %1075 = vmatprep.subr.mxu0 0.0
  %1076 = vmatpush1.msra.mxu0 0.0
  %1077 = vmatprep.subr.mxu0 0.0
  %1078 = vmatpush1.msra.mxu0 0.0
  %1079 = vmatprep.subr.mxu0 0.0
  %1080 = vmatpush1.msra.mxu0 0.0
  %1081 = vmatprep.subr.mxu0 0.0
  %1082 = vmatpush1.msra.mxu0 0.0
  %1083 = vmatprep.subr.mxu0 0.0
  %1084 = vmatpush1.msra.mxu0 0.0
  %1085 = vmatprep.subr.mxu0 0.0
  %1086 = vmatpush1.msra.mxu0 0.0
  %1087 = vmatprep.subr.mxu0 0.0
  %1088 = vmatpush1.msra.mxu0 %v1055
  %1089 = vmatprep.subr.mxu0 0.0
  %1090 = vmatpush2.msra.mxu0 0.0
  %1091 = vmatprep.subr.mxu0 0.0
  %1092 = vmatpush2.msra.mxu0 0.0
  %1093 = vmatprep.subr.mxu0 0.0
  %1094 = vmatpush2.msra.mxu0 0.0
  %1095 = vmatprep.subr.mxu0 0.0
  %1096 = vmatpush2.msra.mxu0 0.0
  %1097 = vmatprep.subr.mxu0 0.0
  %1098 = vmatpush2.msra.mxu0 0.0
  %1099 = vmatprep.subr.mxu0 0.0
  %1100 = vmatpush2.msra.mxu0 0.0
  %1101 = vmatprep.subr.mxu0 0.0
  %1102 = vmatpush2.msra.mxu0 0.0
  %1103 = vmatprep.subr.mxu0 0.0
  %1104 = vmatpush2.msra.mxu0 0.0
  %1105 = vmatprep.subr.mxu0 0.0
  %1106 = vmatpush2.msra.mxu0 0.0
  %1107 = vmatprep.subr.mxu0 0.0
  %1108 = vmatpush2.msra.mxu0 0.0
  %1109 = vmatprep.subr.mxu0 0.0
  %1110 = vmatpush2.msra.mxu0 0.0
  %1111 = vmatprep.subr.mxu0 0.0
  %1112 = vmatpush2.msra.mxu0 0.0
  %1113 = vmatprep.subr.mxu0 0.0
  %1114 = vmatpush2.msra.mxu0 0.0
  %1115 = vmatprep.subr.mxu0 0.0
  %1116 = vmatpush2.msra.mxu0 0.0
  %1117 = vmatprep.subr.mxu0 0.0
  %1118 = vmatpush2.msra.mxu0 0.0
  %1119 = vmatprep.subr.mxu0 0.0
  %1120 = vmatpush2.msra.mxu0 0.0
  %1121 = vmatprep.mubr.f32.mxu0 0.0
  %1122 = vmatmul.mubr.f32.gmra.mxu0 %v1052
  %v1123 = vpop.f32.mrf.mxu0
  %v1124 = vadd.f32 0.0, %v1123
  %v1125 = vpop.f32.mrf.mxu0
  %1126 = vdwg.mxu0
  %v1127 = vadd.f32 %v1046, %v1124
  %1129 = vset.pattern.permute.xlu0 2
  %1130 = vperm.xlu0 %1129, %v22
  %v1131 = vpop.permute.xlu0 %1130
  %v1133 = vadd.f32 %v1127, %v1131
  %vm1134 = vcmp.gt.f32.partialorder %v1133, 0.0
  %v1135 = vmul.f32 %v1133, 0.01
  %v1136 = vsel %vm1134, %v1133, %v1135
  %s1137 = scalar_lea.vmem %s2, 20
  %v1138 = vld [vmem:[%s1137] sm:$0xf]
  %s1139 = scalar_lea.vmem %s2, 24
  %v1140 = vld [vmem:[%s1139] sm:$0xf]
  %1141 = vrot.lane.b32.xlu0 %v1136, 127
  %v1142 = vpop.permute.xlu0 %1141
  %v1144 = vsel %vm731, %v1140, 0
  %v1147 = vsel %vm735, %v1142, 0
  %1149 = vmatprep.subr.mxu0 0.0
  %1150 = vmatpush1.msra.mxu0 0.0
  %1151 = vmatprep.subr.mxu0 0.0
  %1152 = vmatpush1.msra.mxu0 0.0
  %1153 = vmatprep.subr.mxu0 0.0
  %1154 = vmatpush1.msra.mxu0 0.0
  %1155 = vmatprep.subr.mxu0 0.0
  %1156 = vmatpush1.msra.mxu0 0.0
  %1157 = vmatprep.subr.mxu0 0.0
  %1158 = vmatpush1.msra.mxu0 0.0
  %1159 = vmatprep.subr.mxu0 0.0
  %1160 = vmatpush1.msra.mxu0 0.0
  %1161 = vmatprep.subr.mxu0 0.0
  %1162 = vmatpush1.msra.mxu0 0.0
  %1163 = vmatprep.subr.mxu0 0.0
  %1164 = vmatpush1.msra.mxu0 0.0
  %1165 = vmatprep.subr.mxu0 0.0
  %1166 = vmatpush1.msra.mxu0 0.0
  %1167 = vmatprep.subr.mxu0 0.0
  %1168 = vmatpush1.msra.mxu0 0.0
  %1169 = vmatprep.subr.mxu0 0.0
  %1170 = vmatpush1.msra.mxu0 0.0
  %1171 = vmatprep.subr.mxu0 0.0
  %1172 = vmatpush1.msra.mxu0 0.0
  %1173 = vmatprep.subr.mxu0 0.0
  %1174 = vmatpush1.msra.mxu0 0.0
  %1175 = vmatprep.subr.mxu0 0.0
  %1176 = vmatpush1.msra.mxu0 0.0
  %1177 = vmatprep.subr.mxu0 0.0
  %1178 = vmatpush1.msra.mxu0 0.0
  %1179 = vmatprep.subr.mxu0 0.0
  %1180 = vmatpush1.msra.mxu0 %v1147
  %1181 = vmatprep.subr.mxu0 0.0
  %1182 = vmatpush2.msra.mxu0 0.0
  %1183 = vmatprep.subr.mxu0 0.0
  %1184 = vmatpush2.msra.mxu0 0.0
  %1185 = vmatprep.subr.mxu0 0.0
  %1186 = vmatpush2.msra.mxu0 0.0
  %1187 = vmatprep.subr.mxu0 0.0
  %1188 = vmatpush2.msra.mxu0 0.0
  %1189 = vmatprep.subr.mxu0 0.0
  %1190 = vmatpush2.msra.mxu0 0.0
  %1191 = vmatprep.subr.mxu0 0.0
  %1192 = vmatpush2.msra.mxu0 0.0
  %1193 = vmatprep.subr.mxu0 0.0
  %1194 = vmatpush2.msra.mxu0 0.0
  %1195 = vmatprep.subr.mxu0 0.0
  %1196 = vmatpush2.msra.mxu0 0.0
  %1197 = vmatprep.subr.mxu0 0.0
  %1198 = vmatpush2.msra.mxu0 0.0
  %1199 = vmatprep.subr.mxu0 0.0
  %1200 = vmatpush2.msra.mxu0 0.0
  %1201 = vmatprep.subr.mxu0 0.0
  %1202 = vmatpush2.msra.mxu0 0.0
  %1203 = vmatprep.subr.mxu0 0.0
  %1204 = vmatpush2.msra.mxu0 0.0
  %1205 = vmatprep.subr.mxu0 0.0
  %1206 = vmatpush2.msra.mxu0 0.0
  %1207 = vmatprep.subr.mxu0 0.0
  %1208 = vmatpush2.msra.mxu0 0.0
  %1209 = vmatprep.subr.mxu0 0.0
  %1210 = vmatpush2.msra.mxu0 0.0
  %1211 = vmatprep.subr.mxu0 0.0
  %1212 = vmatpush2.msra.mxu0 0.0
  %1213 = vmatprep.mubr.f32.mxu0 0.0
  %1214 = vmatmul.mubr.f32.gmra.mxu0 %v1144
  %v1215 = vpop.f32.mrf.mxu0
  %v1216 = vadd.f32 0.0, %v1215
  %v1217 = vpop.f32.mrf.mxu0
  %1218 = vdwg.mxu0
  %v1220 = vsel %vm731, %v1138, 0
  %v1223 = vsel %vm735, %v1136, 0
  %1225 = vmatprep.subr.mxu0 0.0
  %1226 = vmatpush1.msra.mxu0 0.0
  %1227 = vmatprep.subr.mxu0 0.0
  %1228 = vmatpush1.msra.mxu0 0.0
  %1229 = vmatprep.subr.mxu0 0.0
  %1230 = vmatpush1.msra.mxu0 0.0
  %1231 = vmatprep.subr.mxu0 0.0
  %1232 = vmatpush1.msra.mxu0 0.0
  %1233 = vmatprep.subr.mxu0 0.0
  %1234 = vmatpush1.msra.mxu0 0.0
  %1235 = vmatprep.subr.mxu0 0.0
  %1236 = vmatpush1.msra.mxu0 0.0
  %1237 = vmatprep.subr.mxu0 0.0
  %1238 = vmatpush1.msra.mxu0 0.0
  %1239 = vmatprep.subr.mxu0 0.0
  %1240 = vmatpush1.msra.mxu0 0.0
  %1241 = vmatprep.subr.mxu0 0.0
  %1242 = vmatpush1.msra.mxu0 0.0
  %1243 = vmatprep.subr.mxu0 0.0
  %1244 = vmatpush1.msra.mxu0 0.0
  %1245 = vmatprep.subr.mxu0 0.0
  %1246 = vmatpush1.msra.mxu0 0.0
  %1247 = vmatprep.subr.mxu0 0.0
  %1248 = vmatpush1.msra.mxu0 0.0
  %1249 = vmatprep.subr.mxu0 0.0
  %1250 = vmatpush1.msra.mxu0 0.0
  %1251 = vmatprep.subr.mxu0 0.0
  %1252 = vmatpush1.msra.mxu0 0.0
  %1253 = vmatprep.subr.mxu0 0.0
  %1254 = vmatpush1.msra.mxu0 0.0
  %1255 = vmatprep.subr.mxu0 0.0
  %1256 = vmatpush1.msra.mxu0 %v1223
  %1257 = vmatprep.subr.mxu0 0.0
  %1258 = vmatpush2.msra.mxu0 0.0
  %1259 = vmatprep.subr.mxu0 0.0
  %1260 = vmatpush2.msra.mxu0 0.0
  %1261 = vmatprep.subr.mxu0 0.0
  %1262 = vmatpush2.msra.mxu0 0.0
  %1263 = vmatprep.subr.mxu0 0.0
  %1264 = vmatpush2.msra.mxu0 0.0
  %1265 = vmatprep.subr.mxu0 0.0
  %1266 = vmatpush2.msra.mxu0 0.0
  %1267 = vmatprep.subr.mxu0 0.0
  %1268 = vmatpush2.msra.mxu0 0.0
  %1269 = vmatprep.subr.mxu0 0.0
  %1270 = vmatpush2.msra.mxu0 0.0
  %1271 = vmatprep.subr.mxu0 0.0
  %1272 = vmatpush2.msra.mxu0 0.0
  %1273 = vmatprep.subr.mxu0 0.0
  %1274 = vmatpush2.msra.mxu0 0.0
  %1275 = vmatprep.subr.mxu0 0.0
  %1276 = vmatpush2.msra.mxu0 0.0
  %1277 = vmatprep.subr.mxu0 0.0
  %1278 = vmatpush2.msra.mxu0 0.0
  %1279 = vmatprep.subr.mxu0 0.0
  %1280 = vmatpush2.msra.mxu0 0.0
  %1281 = vmatprep.subr.mxu0 0.0
  %1282 = vmatpush2.msra.mxu0 0.0
  %1283 = vmatprep.subr.mxu0 0.0
  %1284 = vmatpush2.msra.mxu0 0.0
  %1285 = vmatprep.subr.mxu0 0.0
  %1286 = vmatpush2.msra.mxu0 0.0
  %1287 = vmatprep.subr.mxu0 0.0
  %1288 = vmatpush2.msra.mxu0 0.0
  %1289 = vmatprep.mubr.f32.mxu0 0.0
  %1290 = vmatmul.mubr.f32.gmra.mxu0 %v1220
  %v1291 = vpop.f32.mrf.mxu0
  %v1292 = vadd.f32 %v1216, %v1291
  %v1293 = vpop.f32.mrf.mxu0
  %1294 = vdwg.mxu0
  %s1295 = scalar_lea.vmem %s2, 28
  %v1296 = vld [vmem:[%s1295] sm:$0xf]
  %1297 = vrot.lane.b32.xlu0 %v1136, 126
  %v1298 = vpop.permute.xlu0 %1297
  %v1300 = vsel %vm731, %v1296, 0
  %v1303 = vsel %vm735, %v1298, 0
  %1305 = vmatprep.subr.mxu0 0.0
  %1306 = vmatpush1.msra.mxu0 0.0
  %1307 = vmatprep.subr.mxu0 0.0
  %1308 = vmatpush1.msra.mxu0 0.0
  %1309 = vmatprep.subr.mxu0 0.0
  %1310 = vmatpush1.msra.mxu0 0.0
  %1311 = vmatprep.subr.mxu0 0.0
  %1312 = vmatpush1.msra.mxu0 0.0
  %1313 = vmatprep.subr.mxu0 0.0
  %1314 = vmatpush1.msra.mxu0 0.0
  %1315 = vmatprep.subr.mxu0 0.0
  %1316 = vmatpush1.msra.mxu0 0.0
  %1317 = vmatprep.subr.mxu0 0.0
  %1318 = vmatpush1.msra.mxu0 0.0
  %1319 = vmatprep.subr.mxu0 0.0
  %1320 = vmatpush1.msra.mxu0 0.0
  %1321 = vmatprep.subr.mxu0 0.0
  %1322 = vmatpush1.msra.mxu0 0.0
  %1323 = vmatprep.subr.mxu0 0.0
  %1324 = vmatpush1.msra.mxu0 0.0
  %1325 = vmatprep.subr.mxu0 0.0
  %1326 = vmatpush1.msra.mxu0 0.0
  %1327 = vmatprep.subr.mxu0 0.0
  %1328 = vmatpush1.msra.mxu0 0.0
  %1329 = vmatprep.subr.mxu0 0.0
  %1330 = vmatpush1.msra.mxu0 0.0
  %1331 = vmatprep.subr.mxu0 0.0
  %1332 = vmatpush1.msra.mxu0 0.0
  %1333 = vmatprep.subr.mxu0 0.0
  %1334 = vmatpush1.msra.mxu0 0.0
  %1335 = vmatprep.subr.mxu0 0.0
  %1336 = vmatpush1.msra.mxu0 %v1303
  %1337 = vmatprep.subr.mxu0 0.0
  %1338 = vmatpush2.msra.mxu0 0.0
  %1339 = vmatprep.subr.mxu0 0.0
  %1340 = vmatpush2.msra.mxu0 0.0
  %1341 = vmatprep.subr.mxu0 0.0
  %1342 = vmatpush2.msra.mxu0 0.0
  %1343 = vmatprep.subr.mxu0 0.0
  %1344 = vmatpush2.msra.mxu0 0.0
  %1345 = vmatprep.subr.mxu0 0.0
  %1346 = vmatpush2.msra.mxu0 0.0
  %1347 = vmatprep.subr.mxu0 0.0
  %1348 = vmatpush2.msra.mxu0 0.0
  %1349 = vmatprep.subr.mxu0 0.0
  %1350 = vmatpush2.msra.mxu0 0.0
  %1351 = vmatprep.subr.mxu0 0.0
  %1352 = vmatpush2.msra.mxu0 0.0
  %1353 = vmatprep.subr.mxu0 0.0
  %1354 = vmatpush2.msra.mxu0 0.0
  %1355 = vmatprep.subr.mxu0 0.0
  %1356 = vmatpush2.msra.mxu0 0.0
  %1357 = vmatprep.subr.mxu0 0.0
  %1358 = vmatpush2.msra.mxu0 0.0
  %1359 = vmatprep.subr.mxu0 0.0
  %1360 = vmatpush2.msra.mxu0 0.0
  %1361 = vmatprep.subr.mxu0 0.0
  %1362 = vmatpush2.msra.mxu0 0.0
  %1363 = vmatprep.subr.mxu0 0.0
  %1364 = vmatpush2.msra.mxu0 0.0
  %1365 = vmatprep.subr.mxu0 0.0
  %1366 = vmatpush2.msra.mxu0 0.0
  %1367 = vmatprep.subr.mxu0 0.0
  %1368 = vmatpush2.msra.mxu0 0.0
  %1369 = vmatprep.mubr.f32.mxu0 0.0
  %1370 = vmatmul.mubr.f32.gmra.mxu0 %v1300
  %v1371 = vpop.f32.mrf.mxu0
  %v1372 = vadd.f32 0.0, %v1371
  %v1373 = vpop.f32.mrf.mxu0
  %1374 = vdwg.mxu0
  %v1375 = vadd.f32 %v1292, %v1372
  %1376 = vset.pattern.permute.xlu0 3
  %1377 = vperm.xlu0 %1376, %v22
  %v1378 = vpop.permute.xlu0 %1377
  %v1380 = vadd.f32 %v1375, %v1378
  %v1381 = vtanh.pop %v1380
  %v1382 = vadd.f32 %v660, %v1381
  %1383 = vst [vmem:[%s5] sm:$0xf] %v1382
  // Predicated region
  $region22: #{interactor_generate.1} parent=0 // pred_check
    _
  $region23: #{interactor_generate.1} parent=0 // pred_check_branch
    %1385 = sbr.rel (0) target = $region25
  $region24: #{interactor_generate.1} parent=0 // pred_region
    _
  $region25: #{interactor_generate.1} parent=0 // pred_fallthru
    _
  // Predicated region
  $region26: #{interactor_generate.1} parent=0 // pred_check
    _
  $region27: #{interactor_generate.1} parent=0 // pred_check_branch
    %1387 = sbr.rel (0) target = $region29
  $region28: #{interactor_generate.1} parent=0 // pred_region
    _
  $region29: #{interactor_generate.1} parent=0 // pred_fallthru
    _

</llo_original>
